<compile_context>
chip_gen: v6e
topology: v6e:2x2x1
jax: 0.10.0
libtpu: 0.0.40
codegen_flags: <defaults>
</compile_context>

<pallas_src>
import functools

import jax
import jax.numpy as jnp
from jax.experimental import pallas as pl
from jax.experimental.pallas import tpu as pltpu

IN_DIM = 1536
HID_DIM = 512
OUT_DIM = 2
OUT_PAD = 128  # lane-dense padded output width


def _round_up(x, m):
    return ((x + m - 1) // m) * m


def _head_kernel(x_ref, w1_ref, b1_ref, w2_ref, b2_ref, o_ref):
    # First linear: bf16 operands, f32 MXU accumulation.
    h = jnp.dot(x_ref[...], w1_ref[...], preferred_element_type=jnp.float32)
    # Bias + ReLU in f32 on the VPU.
    h = jnp.maximum(h + b1_ref[...], 0.0)
    # Second linear: tiny fraction of FLOPs, kept fully f32 (no cast of h).
    out = jnp.dot(h, w2_ref[...], preferred_element_type=jnp.float32)
    o_ref[...] = (out + b2_ref[...]).astype(o_ref.dtype)


@functools.partial(jax.jit, static_argnames=("block_b",))
def bridgetower_head(x, w1, b1, w2, b2, *, block_b=256):
    """x: [B, 1536] float32 -> logits [B, 2] float32."""
    B, D = x.shape
    assert D == IN_DIM

    # Effective batch tile: large (MXU-filling) by default, shrunk for small B so
    # tiny batches are not padded all the way to block_b. Multiple of 8 (sublanes).
    bb = _round_up(min(block_b, _round_up(B, 8)), 8)
    b_pad = _round_up(B, bb)
    grid = (b_pad // bb,)

    # bf16 inputs for the first matmul; pad batch to a tile multiple.
    x_p = jnp.pad(x, ((0, b_pad - B), (0, 0))).astype(jnp.bfloat16)
    w1_b = w1.astype(jnp.bfloat16)
    b1_r = b1.reshape(1, HID_DIM).astype(jnp.float32)

    # Lane-dense second linear: pad N from 2 -> 128 with zeros, slice afterwards.
    w2_p = jnp.pad(w2.astype(jnp.float32), ((0, 0), (0, OUT_PAD - OUT_DIM)))
    b2_p = jnp.pad(b2.reshape(1, OUT_DIM).astype(jnp.float32),
                   ((0, 0), (0, OUT_PAD - OUT_DIM)))

    out_padded = pl.pallas_call(
        _head_kernel,
        out_shape=jax.ShapeDtypeStruct((b_pad, OUT_PAD), jnp.float32),
        grid_spec=pltpu.PrefetchScalarGridSpec(
            num_scalar_prefetch=0,
            grid=grid,
            in_specs=[
                # batch tile of the (padded, bf16) input
                pl.BlockSpec((bb, IN_DIM), lambda i: (i, 0)),
                # weights / biases: constant index_map -> resident across all tiles
                pl.BlockSpec((IN_DIM, HID_DIM), lambda i: (0, 0)),
                pl.BlockSpec((1, HID_DIM), lambda i: (0, 0)),
                pl.BlockSpec((HID_DIM, OUT_PAD), lambda i: (0, 0)),
                pl.BlockSpec((1, OUT_PAD), lambda i: (0, 0)),
            ],
            out_specs=pl.BlockSpec((bb, OUT_PAD), lambda i: (i, 0)),
        ),
        compiler_params=pltpu.CompilerParams(
            dimension_semantics=("parallel",),
        ),
    )(x_p, w1_b, b1_r, w2_p, b2_p)

    return out_padded[:B, :OUT_DIM]


def _init_params(key):
    """Deterministic init mimicking PyTorch's default Linear init."""
    k1, k2, k3, k4 = jax.random.split(key, 4)
    bound1 = 1.0 / jnp.sqrt(IN_DIM)
    bound2 = 1.0 / jnp.sqrt(HID_DIM)
    w1 = jax.random.uniform(k1, (IN_DIM, HID_DIM), jnp.float32, -bound1, bound1)
    b1 = jax.random.uniform(k2, (HID_DIM,), jnp.float32, -bound1, bound1)
    w2 = jax.random.uniform(k3, (HID_DIM, OUT_DIM), jnp.float32, -bound2, bound2)
    b2 = jax.random.uniform(k4, (OUT_DIM,), jnp.float32, -bound2, bound2)
    return w1, b1, w2, b2


def _reference(x, w1, b1, w2, b2):
    # Matches the kernel's numerics: bf16 first matmul with f32 accumulation,
    # everything else f32.
    h = jnp.dot(x.astype(jnp.bfloat16), w1.astype(jnp.bfloat16),
                preferred_element_type=jnp.float32)
    h = jnp.maximum(h + b1.reshape(1, -1), 0.0)
    return jnp.dot(h, w2) + b2.reshape(1, -1)


if __name__ == "__main__":
    key = jax.random.PRNGKey(0)
    kx, kp = jax.random.split(key)

    B = 6  # exercises the pad-to-tile + slice path (padded to 8 rows internally)
    x = jax.random.normal(kx, (B, IN_DIM), jnp.float32)
    w1, b1, w2, b2 = _init_params(kp)

    logits = bridgetower_head(x, w1, b1, w2, b2)
    logits = jax.block_until_ready(logits)

    ref = _reference(x, w1, b1, w2, b2)
    assert logits.shape == (B, OUT_DIM)
    assert jnp.allclose(logits, ref, atol=1e-2, rtol=1e-2), "mismatch vs reference"

    print("KERNEL_OK")
</pallas_src>

<mosaic_0001>
module attributes {stable_mosaic.version = 11 : i64} {
  func.func @_head_kernel(%arg0: i32, %arg1: memref<8x1536xbf16, #tpu.memory_space<vmem>>, %arg2: memref<1536x512xbf16, #tpu.memory_space<vmem>>, %arg3: memref<1x512xf32, #tpu.memory_space<vmem>>, %arg4: memref<512x128xf32, #tpu.memory_space<vmem>>, %arg5: memref<1x128xf32, #tpu.memory_space<vmem>>, %arg6: memref<8x128xf32, #tpu.memory_space<vmem>>) attributes {dimension_semantics = [#tpu.dimension_semantics<parallel>], iteration_bounds = array<i64: 1>, scalar_prefetch = 0 : i64, scratch_operands = 0 : i64, tpu.core_type = #tpu.core_type<tc>, window_params = [{transform_indices = @transform_0, window_bounds = array<i64: 8, 1536>}, {pipeline_mode = #tpu.pipeline_mode<synchronous>, transform_indices = @transform_1, window_bounds = array<i64: 1536, 512>}, {pipeline_mode = #tpu.pipeline_mode<synchronous>, transform_indices = @transform_2, window_bounds = array<i64: 1, 512>}, {pipeline_mode = #tpu.pipeline_mode<synchronous>, transform_indices = @transform_3, window_bounds = array<i64: 512, 128>}, {pipeline_mode = #tpu.pipeline_mode<synchronous>, transform_indices = @transform_4, window_bounds = array<i64: 1, 128>}, {transform_indices = @transform_5, window_bounds = array<i64: 8, 128>}]} {
    %c0 = arith.constant 0 : index
    %c0_0 = arith.constant 0 : index
    %0 = vector.load %arg1[%c0, %c0_0] : memref<8x1536xbf16, #tpu.memory_space<vmem>>, vector<8x1536xbf16>
    %c0_1 = arith.constant 0 : index
    %c0_2 = arith.constant 0 : index
    %1 = vector.load %arg2[%c0_1, %c0_2] : memref<1536x512xbf16, #tpu.memory_space<vmem>>, vector<1536x512xbf16>
    %cst = arith.constant dense<0.000000e+00> : vector<8x512xf32>
    %2 = tpu.matmul %0, %1, %cst {dimension_numbers = #tpu.dot_dimension_numbers<[1], [0], [0], [1], [0, 0, 1, 1], [], []>} : vector<8x1536xbf16>, vector<1536x512xbf16>, vector<8x512xf32> -> vector<8x512xf32>
    %c0_3 = arith.constant 0 : index
    %c0_4 = arith.constant 0 : index
    %3 = vector.load %arg3[%c0_3, %c0_4] : memref<1x512xf32, #tpu.memory_space<vmem>>, vector<1x512xf32>
    %4 = vector.broadcast %3 : vector<1x512xf32> to vector<8x512xf32>
    %5 = arith.addf %2, %4 : vector<8x512xf32>
    %cst_5 = arith.constant 0.000000e+00 : f32
    %6 = vector.broadcast %cst_5 : f32 to vector<8x512xf32>
    %7 = arith.maximumf %5, %6 : vector<8x512xf32>
    %c0_6 = arith.constant 0 : index
    %c0_7 = arith.constant 0 : index
    %8 = vector.load %arg4[%c0_6, %c0_7] : memref<512x128xf32, #tpu.memory_space<vmem>>, vector<512x128xf32>
    %cst_8 = arith.constant dense<0.000000e+00> : vector<8x128xf32>
    %9 = tpu.matmul %7, %8, %cst_8 {dimension_numbers = #tpu.dot_dimension_numbers<[1], [0], [0], [1], [0, 0, 1, 1], [], []>} : vector<8x512xf32>, vector<512x128xf32>, vector<8x128xf32> -> vector<8x128xf32>
    %c0_9 = arith.constant 0 : index
    %c0_10 = arith.constant 0 : index
    %10 = vector.load %arg5[%c0_9, %c0_10] : memref<1x128xf32, #tpu.memory_space<vmem>>, vector<1x128xf32>
    %11 = vector.broadcast %10 : vector<1x128xf32> to vector<8x128xf32>
    %12 = arith.addf %9, %11 : vector<8x128xf32>
    %c0_11 = arith.constant 0 : index
    %c0_12 = arith.constant 0 : index
    %13 = vector.load %arg6[%c0_11, %c0_12] : memref<8x128xf32, #tpu.memory_space<vmem>>, vector<8x128xf32>
    tpu.vector_store %arg6[%c0_11, %c0_12], %12 {strides = array<i32>} : memref<8x128xf32, #tpu.memory_space<vmem>>, vector<8x128xf32>,
    return
  }
  func.func @transform_0(%arg0: i32) -> (i32, i32) {
    %c0_i32 = arith.constant 0 : i32
    %c0_i32_0 = arith.constant 0 : i32
    return %arg0, %c0_i32 : i32, i32
  }
  func.func @transform_1(%arg0: i32) -> (i32, i32) {
    %c0_i32 = arith.constant 0 : i32
    %c0_i32_0 = arith.constant 0 : i32
    %c0_i32_1 = arith.constant 0 : i32
    return %c0_i32, %c0_i32_0 : i32, i32
  }
  func.func @transform_2(%arg0: i32) -> (i32, i32) {
    %c0_i32 = arith.constant 0 : i32
    %c0_i32_0 = arith.constant 0 : i32
    %c0_i32_1 = arith.constant 0 : i32
    return %c0_i32, %c0_i32_0 : i32, i32
  }
  func.func @transform_3(%arg0: i32) -> (i32, i32) {
    %c0_i32 = arith.constant 0 : i32
    %c0_i32_0 = arith.constant 0 : i32
    %c0_i32_1 = arith.constant 0 : i32
    return %c0_i32, %c0_i32_0 : i32, i32
  }
  func.func @transform_4(%arg0: i32) -> (i32, i32) {
    %c0_i32 = arith.constant 0 : i32
    %c0_i32_0 = arith.constant 0 : i32
    %c0_i32_1 = arith.constant 0 : i32
    return %c0_i32, %c0_i32_0 : i32, i32
  }
  func.func @transform_5(%arg0: i32) -> (i32, i32) {
    %c0_i32 = arith.constant 0 : i32
    %c0_i32_0 = arith.constant 0 : i32
    return %arg0, %c0_i32 : i32, i32
  }
}

</mosaic_0001>

<llo_original>
// kernel: bridgetower_head.1
$region0: #{bridgetower_head.1}
  #allocation0 [shape = 'u32[]', space=smem, size = 0x4, offset = 0x4, fixed_abs, tag = 'smem constant byte address 0x4 - core index']
  #allocation1 [shape = 'u32[144,128]{1,0:T(1,128)}', space=vmem, size = 0x12000, scoped, tag = 'internal scratch']
  %s0 = inlined_call_operand.vmem [shape: bf16[8,1536], index: 0, kind: input, shape index: {}]
  %s1 = inlined_call_operand.vmem [shape: bf16[1536,512], index: 1, kind: input, shape index: {}]
  %s2 = inlined_call_operand.vmem [shape: f32[1,512], index: 2, kind: input, shape index: {}]
  %s3 = inlined_call_operand.vmem [shape: f32[512,128], index: 3, kind: input, shape index: {}]
  %s4 = inlined_call_operand.vmem [shape: f32[1,128], index: 4, kind: input, shape index: {}]
  %s5 = inlined_call_operand.vmem [shape: f32[8,128], index: 5, kind: output, shape index: {}]
  %s6 = sld [smem:[#allocation0]]
  $region30: #{bridgetower_head.1} parent=0
    _
  %s8 = ssub.s32 1, %s6
  %s9 = scalar_select 0, %s8, %s6
  // Predicated region
  $region2: #{bridgetower_head.1} parent=0 // pred_check
    _
  $region3: #{bridgetower_head.1} parent=0 // pred_check_branch
    %11 = sbr.rel (0) target = $region5
  $region4: #{bridgetower_head.1} parent=0 // pred_region
    _
  $region5: #{bridgetower_head.1} parent=0 // pred_fallthru
    _
  // Predicated region
  $region6: #{bridgetower_head.1} parent=0 // pred_check
    _
  $region7: #{bridgetower_head.1} parent=0 // pred_check_branch
    %13 = sbr.rel (0) target = $region9
  $region8: #{bridgetower_head.1} parent=0 // pred_region
    _
  $region9: #{bridgetower_head.1} parent=0 // pred_fallthru
    _
  // Predicated region
  $region10: #{bridgetower_head.1} parent=0 // pred_check
    _
  $region11: #{bridgetower_head.1} parent=0 // pred_check_branch
    %15 = sbr.rel (0) target = $region13
  $region12: #{bridgetower_head.1} parent=0 // pred_region
    _
  $region13: #{bridgetower_head.1} parent=0 // pred_fallthru
    _
  // Predicated region
  $region14: #{bridgetower_head.1} parent=0 // pred_check
    _
  $region15: #{bridgetower_head.1} parent=0 // pred_check_branch
    %17 = sbr.rel (0) target = $region17
  $region16: #{bridgetower_head.1} parent=0 // pred_region
    _
  $region17: #{bridgetower_head.1} parent=0 // pred_fallthru
    _
  // Predicated region
  $region18: #{bridgetower_head.1} parent=0 // pred_check
    _
  $region19: #{bridgetower_head.1} parent=0 // pred_check_branch
    %19 = sbr.rel (0) target = $region21
  $region20: #{bridgetower_head.1} parent=0 // pred_region
    _
  $region21: #{bridgetower_head.1} parent=0 // pred_fallthru
    _
  %v20 = vld [vmem:[%s0] sm:$0xff]
  %v21 = vld [vmem:[%s0 + $0x8] sm:$0xff]
  %v22 = vld [vmem:[%s0 + $0x10] sm:$0xff]
  %v23 = vld [vmem:[%s0 + $0x18] sm:$0xff]
  %v24 = vld [vmem:[%s0 + $0x20] sm:$0xff]
  %v25 = vld [vmem:[%s0 + $0x28] sm:$0xff]
  %v26 = vld [vmem:[%s1] sm:$0xff]
  %v27 = vld [vmem:[%s1 + $0x8] sm:$0xff]
  %v28 = vld [vmem:[%s1 + $0x10] sm:$0xff]
  %v29 = vld [vmem:[%s1 + $0x18] sm:$0xff]
  %v30 = vld [vmem:[%s1 + $0x20] sm:$0xff]
  %v31 = vld [vmem:[%s1 + $0x28] sm:$0xff]
  %v32 = vld [vmem:[%s1 + $0x30] sm:$0xff]
  %v33 = vld [vmem:[%s1 + $0x38] sm:$0xff]
  %v34 = vld [vmem:[%s1 + $0x40] sm:$0xff]
  %v35 = vld [vmem:[%s1 + $0x48] sm:$0xff]
  %v36 = vld [vmem:[%s1 + $0x50] sm:$0xff]
  %v37 = vld [vmem:[%s1 + $0x58] sm:$0xff]
  %v38 = vld [vmem:[%s1 + $0x60] sm:$0xff]
  %v39 = vld [vmem:[%s1 + $0x68] sm:$0xff]
  %v40 = vld [vmem:[%s1 + $0x70] sm:$0xff]
  %v41 = vld [vmem:[%s1 + $0x78] sm:$0xff]
  %v42 = vld [vmem:[%s1 + $0x80] sm:$0xff]
  %v43 = vld [vmem:[%s1 + $0x88] sm:$0xff]
  %v44 = vld [vmem:[%s1 + $0x90] sm:$0xff]
  %v45 = vld [vmem:[%s1 + $0x98] sm:$0xff]
  %v46 = vld [vmem:[%s1 + $0xa0] sm:$0xff]
  %v47 = vld [vmem:[%s1 + $0xa8] sm:$0xff]
  %v48 = vld [vmem:[%s1 + $0xb0] sm:$0xff]
  %v49 = vld [vmem:[%s1 + $0xb8] sm:$0xff]
  %v50 = vld [vmem:[%s1 + $0xc0] sm:$0xff]
  %v51 = vld [vmem:[%s1 + $0xc8] sm:$0xff]
  %v52 = vld [vmem:[%s1 + $0xd0] sm:$0xff]
  %v53 = vld [vmem:[%s1 + $0xd8] sm:$0xff]
  %v54 = vld [vmem:[%s1 + $0xe0] sm:$0xff]
  %v55 = vld [vmem:[%s1 + $0xe8] sm:$0xff]
  %v56 = vld [vmem:[%s1 + $0xf0] sm:$0xff]
  %v57 = vld [vmem:[%s1 + $0xf8] sm:$0xff]
  %v58 = vld [vmem:[%s1 + $0x100] sm:$0xff]
  %v59 = vld [vmem:[%s1 + $0x108] sm:$0xff]
  %v60 = vld [vmem:[%s1 + $0x110] sm:$0xff]
  %v61 = vld [vmem:[%s1 + $0x118] sm:$0xff]
  %v62 = vld [vmem:[%s1 + $0x120] sm:$0xff]
  %v63 = vld [vmem:[%s1 + $0x128] sm:$0xff]
  %v64 = vld [vmem:[%s1 + $0x130] sm:$0xff]
  %v65 = vld [vmem:[%s1 + $0x138] sm:$0xff]
  %v66 = vld [vmem:[%s1 + $0x140] sm:$0xff]
  %v67 = vld [vmem:[%s1 + $0x148] sm:$0xff]
  %v68 = vld [vmem:[%s1 + $0x150] sm:$0xff]
  %v69 = vld [vmem:[%s1 + $0x158] sm:$0xff]
  %v70 = vld [vmem:[%s1 + $0x160] sm:$0xff]
  %v71 = vld [vmem:[%s1 + $0x168] sm:$0xff]
  %v72 = vld [vmem:[%s1 + $0x170] sm:$0xff]
  %v73 = vld [vmem:[%s1 + $0x178] sm:$0xff]
  %v74 = vld [vmem:[%s1 + $0x180] sm:$0xff]
  %v75 = vld [vmem:[%s1 + $0x188] sm:$0xff]
  %v76 = vld [vmem:[%s1 + $0x190] sm:$0xff]
  %v77 = vld [vmem:[%s1 + $0x198] sm:$0xff]
  %v78 = vld [vmem:[%s1 + $0x1a0] sm:$0xff]
  %v79 = vld [vmem:[%s1 + $0x1a8] sm:$0xff]
  %v80 = vld [vmem:[%s1 + $0x1b0] sm:$0xff]
  %v81 = vld [vmem:[%s1 + $0x1b8] sm:$0xff]
  %v82 = vld [vmem:[%s1 + $0x1c0] sm:$0xff]
  %v83 = vld [vmem:[%s1 + $0x1c8] sm:$0xff]
  %v84 = vld [vmem:[%s1 + $0x1d0] sm:$0xff]
  %v85 = vld [vmem:[%s1 + $0x1d8] sm:$0xff]
  %v86 = vld [vmem:[%s1 + $0x1e0] sm:$0xff]
  %v87 = vld [vmem:[%s1 + $0x1e8] sm:$0xff]
  %v88 = vld [vmem:[%s1 + $0x1f0] sm:$0xff]
  %v89 = vld [vmem:[%s1 + $0x1f8] sm:$0xff]
  %v90 = vld [vmem:[%s1 + $0x200] sm:$0xff]
  %v91 = vld [vmem:[%s1 + $0x208] sm:$0xff]
  %v92 = vld [vmem:[%s1 + $0x210] sm:$0xff]
  %v93 = vld [vmem:[%s1 + $0x218] sm:$0xff]
  %v94 = vld [vmem:[%s1 + $0x220] sm:$0xff]
  %v95 = vld [vmem:[%s1 + $0x228] sm:$0xff]
  %v96 = vld [vmem:[%s1 + $0x230] sm:$0xff]
  %v97 = vld [vmem:[%s1 + $0x238] sm:$0xff]
  %v98 = vld [vmem:[%s1 + $0x240] sm:$0xff]
  %v99 = vld [vmem:[%s1 + $0x248] sm:$0xff]
  %v100 = vld [vmem:[%s1 + $0x250] sm:$0xff]
  %v101 = vld [vmem:[%s1 + $0x258] sm:$0xff]
  %v102 = vld [vmem:[%s1 + $0x260] sm:$0xff]
  %v103 = vld [vmem:[%s1 + $0x268] sm:$0xff]
  %v104 = vld [vmem:[%s1 + $0x270] sm:$0xff]
  %v105 = vld [vmem:[%s1 + $0x278] sm:$0xff]
  %v106 = vld [vmem:[%s1 + $0x280] sm:$0xff]
  %v107 = vld [vmem:[%s1 + $0x288] sm:$0xff]
  %v108 = vld [vmem:[%s1 + $0x290] sm:$0xff]
  %v109 = vld [vmem:[%s1 + $0x298] sm:$0xff]
  %v110 = vld [vmem:[%s1 + $0x2a0] sm:$0xff]
  %v111 = vld [vmem:[%s1 + $0x2a8] sm:$0xff]
  %v112 = vld [vmem:[%s1 + $0x2b0] sm:$0xff]
  %v113 = vld [vmem:[%s1 + $0x2b8] sm:$0xff]
  %v114 = vld [vmem:[%s1 + $0x2c0] sm:$0xff]
  %v115 = vld [vmem:[%s1 + $0x2c8] sm:$0xff]
  %v116 = vld [vmem:[%s1 + $0x2d0] sm:$0xff]
  %v117 = vld [vmem:[%s1 + $0x2d8] sm:$0xff]
  %v118 = vld [vmem:[%s1 + $0x2e0] sm:$0xff]
  %v119 = vld [vmem:[%s1 + $0x2e8] sm:$0xff]
  %v120 = vld [vmem:[%s1 + $0x2f0] sm:$0xff]
  %v121 = vld [vmem:[%s1 + $0x2f8] sm:$0xff]
  %v122 = vld [vmem:[%s1 + $0x300] sm:$0xff]
  %v123 = vld [vmem:[%s1 + $0x308] sm:$0xff]
  %v124 = vld [vmem:[%s1 + $0x310] sm:$0xff]
  %v125 = vld [vmem:[%s1 + $0x318] sm:$0xff]
  %v126 = vld [vmem:[%s1 + $0x320] sm:$0xff]
  %v127 = vld [vmem:[%s1 + $0x328] sm:$0xff]
  %v128 = vld [vmem:[%s1 + $0x330] sm:$0xff]
  %v129 = vld [vmem:[%s1 + $0x338] sm:$0xff]
  %v130 = vld [vmem:[%s1 + $0x340] sm:$0xff]
  %v131 = vld [vmem:[%s1 + $0x348] sm:$0xff]
  %v132 = vld [vmem:[%s1 + $0x350] sm:$0xff]
  %v133 = vld [vmem:[%s1 + $0x358] sm:$0xff]
  %v134 = vld [vmem:[%s1 + $0x360] sm:$0xff]
  %v135 = vld [vmem:[%s1 + $0x368] sm:$0xff]
  %v136 = vld [vmem:[%s1 + $0x370] sm:$0xff]
  %v137 = vld [vmem:[%s1 + $0x378] sm:$0xff]
  %v138 = vld [vmem:[%s1 + $0x380] sm:$0xff]
  %v139 = vld [vmem:[%s1 + $0x388] sm:$0xff]
  %v140 = vld [vmem:[%s1 + $0x390] sm:$0xff]
  %v141 = vld [vmem:[%s1 + $0x398] sm:$0xff]
  %v142 = vld [vmem:[%s1 + $0x3a0] sm:$0xff]
  %v143 = vld [vmem:[%s1 + $0x3a8] sm:$0xff]
  %v144 = vld [vmem:[%s1 + $0x3b0] sm:$0xff]
  %v145 = vld [vmem:[%s1 + $0x3b8] sm:$0xff]
  %v146 = vld [vmem:[%s1 + $0x3c0] sm:$0xff]
  %v147 = vld [vmem:[%s1 + $0x3c8] sm:$0xff]
  %v148 = vld [vmem:[%s1 + $0x3d0] sm:$0xff]
  %v149 = vld [vmem:[%s1 + $0x3d8] sm:$0xff]
  %v150 = vld [vmem:[%s1 + $0x3e0] sm:$0xff]
  %v151 = vld [vmem:[%s1 + $0x3e8] sm:$0xff]
  %v152 = vld [vmem:[%s1 + $0x3f0] sm:$0xff]
  %v153 = vld [vmem:[%s1 + $0x3f8] sm:$0xff]
  %v154 = vld [vmem:[%s1 + $0x400] sm:$0xff]
  %v155 = vld [vmem:[%s1 + $0x408] sm:$0xff]
  %v156 = vld [vmem:[%s1 + $0x410] sm:$0xff]
  %v157 = vld [vmem:[%s1 + $0x418] sm:$0xff]
  %v158 = vld [vmem:[%s1 + $0x420] sm:$0xff]
  %v159 = vld [vmem:[%s1 + $0x428] sm:$0xff]
  %v160 = vld [vmem:[%s1 + $0x430] sm:$0xff]
  %v161 = vld [vmem:[%s1 + $0x438] sm:$0xff]
  %v162 = vld [vmem:[%s1 + $0x440] sm:$0xff]
  %v163 = vld [vmem:[%s1 + $0x448] sm:$0xff]
  %v164 = vld [vmem:[%s1 + $0x450] sm:$0xff]
  %v165 = vld [vmem:[%s1 + $0x458] sm:$0xff]
  %v166 = vld [vmem:[%s1 + $0x460] sm:$0xff]
  %v167 = vld [vmem:[%s1 + $0x468] sm:$0xff]
  %v168 = vld [vmem:[%s1 + $0x470] sm:$0xff]
  %v169 = vld [vmem:[%s1 + $0x478] sm:$0xff]
  %v170 = vld [vmem:[%s1 + $0x480] sm:$0xff]
  %v171 = vld [vmem:[%s1 + $0x488] sm:$0xff]
  %v172 = vld [vmem:[%s1 + $0x490] sm:$0xff]
  %v173 = vld [vmem:[%s1 + $0x498] sm:$0xff]
  %v174 = vld [vmem:[%s1 + $0x4a0] sm:$0xff]
  %v175 = vld [vmem:[%s1 + $0x4a8] sm:$0xff]
  %v176 = vld [vmem:[%s1 + $0x4b0] sm:$0xff]
  %v177 = vld [vmem:[%s1 + $0x4b8] sm:$0xff]
  %v178 = vld [vmem:[%s1 + $0x4c0] sm:$0xff]
  %v179 = vld [vmem:[%s1 + $0x4c8] sm:$0xff]
  %v180 = vld [vmem:[%s1 + $0x4d0] sm:$0xff]
  %v181 = vld [vmem:[%s1 + $0x4d8] sm:$0xff]
  %v182 = vld [vmem:[%s1 + $0x4e0] sm:$0xff]
  %v183 = vld [vmem:[%s1 + $0x4e8] sm:$0xff]
  %v184 = vld [vmem:[%s1 + $0x4f0] sm:$0xff]
  %v185 = vld [vmem:[%s1 + $0x4f8] sm:$0xff]
  %v186 = vld [vmem:[%s1 + $0x500] sm:$0xff]
  %v187 = vld [vmem:[%s1 + $0x508] sm:$0xff]
  %v188 = vld [vmem:[%s1 + $0x510] sm:$0xff]
  %v189 = vld [vmem:[%s1 + $0x518] sm:$0xff]
  %v190 = vld [vmem:[%s1 + $0x520] sm:$0xff]
  %v191 = vld [vmem:[%s1 + $0x528] sm:$0xff]
  %v192 = vld [vmem:[%s1 + $0x530] sm:$0xff]
  %v193 = vld [vmem:[%s1 + $0x538] sm:$0xff]
  %v194 = vld [vmem:[%s1 + $0x540] sm:$0xff]
  %v195 = vld [vmem:[%s1 + $0x548] sm:$0xff]
  %v196 = vld [vmem:[%s1 + $0x550] sm:$0xff]
  %v197 = vld [vmem:[%s1 + $0x558] sm:$0xff]
  %v198 = vld [vmem:[%s1 + $0x560] sm:$0xff]
  %v199 = vld [vmem:[%s1 + $0x568] sm:$0xff]
  %v200 = vld [vmem:[%s1 + $0x570] sm:$0xff]
  %v201 = vld [vmem:[%s1 + $0x578] sm:$0xff]
  %v202 = vld [vmem:[%s1 + $0x580] sm:$0xff]
  %v203 = vld [vmem:[%s1 + $0x588] sm:$0xff]
  %v204 = vld [vmem:[%s1 + $0x590] sm:$0xff]
  %v205 = vld [vmem:[%s1 + $0x598] sm:$0xff]
  %v206 = vld [vmem:[%s1 + $0x5a0] sm:$0xff]
  %v207 = vld [vmem:[%s1 + $0x5a8] sm:$0xff]
  %v208 = vld [vmem:[%s1 + $0x5b0] sm:$0xff]
  %v209 = vld [vmem:[%s1 + $0x5b8] sm:$0xff]
  %v210 = vld [vmem:[%s1 + $0x5c0] sm:$0xff]
  %v211 = vld [vmem:[%s1 + $0x5c8] sm:$0xff]
  %v212 = vld [vmem:[%s1 + $0x5d0] sm:$0xff]
  %v213 = vld [vmem:[%s1 + $0x5d8] sm:$0xff]
  %v214 = vld [vmem:[%s1 + $0x5e0] sm:$0xff]
  %v215 = vld [vmem:[%s1 + $0x5e8] sm:$0xff]
  %v216 = vld [vmem:[%s1 + $0x5f0] sm:$0xff]
  %v217 = vld [vmem:[%s1 + $0x5f8] sm:$0xff]
  %v218 = vld [vmem:[%s1 + $0x600] sm:$0xff]
  %v219 = vld [vmem:[%s1 + $0x608] sm:$0xff]
  %v220 = vld [vmem:[%s1 + $0x610] sm:$0xff]
  %v221 = vld [vmem:[%s1 + $0x618] sm:$0xff]
  %v222 = vld [vmem:[%s1 + $0x620] sm:$0xff]
  %v223 = vld [vmem:[%s1 + $0x628] sm:$0xff]
  %v224 = vld [vmem:[%s1 + $0x630] sm:$0xff]
  %v225 = vld [vmem:[%s1 + $0x638] sm:$0xff]
  %v226 = vld [vmem:[%s1 + $0x640] sm:$0xff]
  %v227 = vld [vmem:[%s1 + $0x648] sm:$0xff]
  %v228 = vld [vmem:[%s1 + $0x650] sm:$0xff]
  %v229 = vld [vmem:[%s1 + $0x658] sm:$0xff]
  %v230 = vld [vmem:[%s1 + $0x660] sm:$0xff]
  %v231 = vld [vmem:[%s1 + $0x668] sm:$0xff]
  %v232 = vld [vmem:[%s1 + $0x670] sm:$0xff]
  %v233 = vld [vmem:[%s1 + $0x678] sm:$0xff]
  %v234 = vld [vmem:[%s1 + $0x680] sm:$0xff]
  %v235 = vld [vmem:[%s1 + $0x688] sm:$0xff]
  %v236 = vld [vmem:[%s1 + $0x690] sm:$0xff]
  %v237 = vld [vmem:[%s1 + $0x698] sm:$0xff]
  %v238 = vld [vmem:[%s1 + $0x6a0] sm:$0xff]
  %v239 = vld [vmem:[%s1 + $0x6a8] sm:$0xff]
  %v240 = vld [vmem:[%s1 + $0x6b0] sm:$0xff]
  %v241 = vld [vmem:[%s1 + $0x6b8] sm:$0xff]
  %v242 = vld [vmem:[%s1 + $0x6c0] sm:$0xff]
  %v243 = vld [vmem:[%s1 + $0x6c8] sm:$0xff]
  %v244 = vld [vmem:[%s1 + $0x6d0] sm:$0xff]
  %v245 = vld [vmem:[%s1 + $0x6d8] sm:$0xff]
  %v246 = vld [vmem:[%s1 + $0x6e0] sm:$0xff]
  %v247 = vld [vmem:[%s1 + $0x6e8] sm:$0xff]
  %v248 = vld [vmem:[%s1 + $0x6f0] sm:$0xff]
  %v249 = vld [vmem:[%s1 + $0x6f8] sm:$0xff]
  %v250 = vld [vmem:[%s1 + $0x700] sm:$0xff]
  %v251 = vld [vmem:[%s1 + $0x708] sm:$0xff]
  %v252 = vld [vmem:[%s1 + $0x710] sm:$0xff]
  %v253 = vld [vmem:[%s1 + $0x718] sm:$0xff]
  %v254 = vld [vmem:[%s1 + $0x720] sm:$0xff]
  %v255 = vld [vmem:[%s1 + $0x728] sm:$0xff]
  %v256 = vld [vmem:[%s1 + $0x730] sm:$0xff]
  %v257 = vld [vmem:[%s1 + $0x738] sm:$0xff]
  %v258 = vld [vmem:[%s1 + $0x740] sm:$0xff]
  %v259 = vld [vmem:[%s1 + $0x748] sm:$0xff]
  %v260 = vld [vmem:[%s1 + $0x750] sm:$0xff]
  %v261 = vld [vmem:[%s1 + $0x758] sm:$0xff]
  %v262 = vld [vmem:[%s1 + $0x760] sm:$0xff]
  %v263 = vld [vmem:[%s1 + $0x768] sm:$0xff]
  %v264 = vld [vmem:[%s1 + $0x770] sm:$0xff]
  %v265 = vld [vmem:[%s1 + $0x778] sm:$0xff]
  %v266 = vld [vmem:[%s1 + $0x780] sm:$0xff]
  %v267 = vld [vmem:[%s1 + $0x788] sm:$0xff]
  %v268 = vld [vmem:[%s1 + $0x790] sm:$0xff]
  %v269 = vld [vmem:[%s1 + $0x798] sm:$0xff]
  %v270 = vld [vmem:[%s1 + $0x7a0] sm:$0xff]
  %v271 = vld [vmem:[%s1 + $0x7a8] sm:$0xff]
  %v272 = vld [vmem:[%s1 + $0x7b0] sm:$0xff]
  %v273 = vld [vmem:[%s1 + $0x7b8] sm:$0xff]
  %v274 = vld [vmem:[%s1 + $0x7c0] sm:$0xff]
  %v275 = vld [vmem:[%s1 + $0x7c8] sm:$0xff]
  %v276 = vld [vmem:[%s1 + $0x7d0] sm:$0xff]
  %v277 = vld [vmem:[%s1 + $0x7d8] sm:$0xff]
  %v278 = vld [vmem:[%s1 + $0x7e0] sm:$0xff]
  %v279 = vld [vmem:[%s1 + $0x7e8] sm:$0xff]
  %v280 = vld [vmem:[%s1 + $0x7f0] sm:$0xff]
  %v281 = vld [vmem:[%s1 + $0x7f8] sm:$0xff]
  %v282 = vld [vmem:[%s1 + $0x800] sm:$0xff]
  %v283 = vld [vmem:[%s1 + $0x808] sm:$0xff]
  %v284 = vld [vmem:[%s1 + $0x810] sm:$0xff]
  %v285 = vld [vmem:[%s1 + $0x818] sm:$0xff]
  %v286 = vld [vmem:[%s1 + $0x820] sm:$0xff]
  %v287 = vld [vmem:[%s1 + $0x828] sm:$0xff]
  %v288 = vld [vmem:[%s1 + $0x830] sm:$0xff]
  %v289 = vld [vmem:[%s1 + $0x838] sm:$0xff]
  %v290 = vld [vmem:[%s1 + $0x840] sm:$0xff]
  %v291 = vld [vmem:[%s1 + $0x848] sm:$0xff]
  %v292 = vld [vmem:[%s1 + $0x850] sm:$0xff]
  %v293 = vld [vmem:[%s1 + $0x858] sm:$0xff]
  %v294 = vld [vmem:[%s1 + $0x860] sm:$0xff]
  %v295 = vld [vmem:[%s1 + $0x868] sm:$0xff]
  %v296 = vld [vmem:[%s1 + $0x870] sm:$0xff]
  %v297 = vld [vmem:[%s1 + $0x878] sm:$0xff]
  %v298 = vld [vmem:[%s1 + $0x880] sm:$0xff]
  %v299 = vld [vmem:[%s1 + $0x888] sm:$0xff]
  %v300 = vld [vmem:[%s1 + $0x890] sm:$0xff]
  %v301 = vld [vmem:[%s1 + $0x898] sm:$0xff]
  %v302 = vld [vmem:[%s1 + $0x8a0] sm:$0xff]
  %v303 = vld [vmem:[%s1 + $0x8a8] sm:$0xff]
  %v304 = vld [vmem:[%s1 + $0x8b0] sm:$0xff]
  %v305 = vld [vmem:[%s1 + $0x8b8] sm:$0xff]
  %v306 = vld [vmem:[%s1 + $0x8c0] sm:$0xff]
  %v307 = vld [vmem:[%s1 + $0x8c8] sm:$0xff]
  %v308 = vld [vmem:[%s1 + $0x8d0] sm:$0xff]
  %v309 = vld [vmem:[%s1 + $0x8d8] sm:$0xff]
  %v310 = vld [vmem:[%s1 + $0x8e0] sm:$0xff]
  %v311 = vld [vmem:[%s1 + $0x8e8] sm:$0xff]
  %v312 = vld [vmem:[%s1 + $0x8f0] sm:$0xff]
  %v313 = vld [vmem:[%s1 + $0x8f8] sm:$0xff]
  %v314 = vld [vmem:[%s1 + $0x900] sm:$0xff]
  %v315 = vld [vmem:[%s1 + $0x908] sm:$0xff]
  %v316 = vld [vmem:[%s1 + $0x910] sm:$0xff]
  %v317 = vld [vmem:[%s1 + $0x918] sm:$0xff]
  %v318 = vld [vmem:[%s1 + $0x920] sm:$0xff]
  %v319 = vld [vmem:[%s1 + $0x928] sm:$0xff]
  %v320 = vld [vmem:[%s1 + $0x930] sm:$0xff]
  %v321 = vld [vmem:[%s1 + $0x938] sm:$0xff]
  %v322 = vld [vmem:[%s1 + $0x940] sm:$0xff]
  %v323 = vld [vmem:[%s1 + $0x948] sm:$0xff]
  %v324 = vld [vmem:[%s1 + $0x950] sm:$0xff]
  %v325 = vld [vmem:[%s1 + $0x958] sm:$0xff]
  %v326 = vld [vmem:[%s1 + $0x960] sm:$0xff]
  %v327 = vld [vmem:[%s1 + $0x968] sm:$0xff]
  %v328 = vld [vmem:[%s1 + $0x970] sm:$0xff]
  %v329 = vld [vmem:[%s1 + $0x978] sm:$0xff]
  %v330 = vld [vmem:[%s1 + $0x980] sm:$0xff]
  %v331 = vld [vmem:[%s1 + $0x988] sm:$0xff]
  %v332 = vld [vmem:[%s1 + $0x990] sm:$0xff]
  %v333 = vld [vmem:[%s1 + $0x998] sm:$0xff]
  %v334 = vld [vmem:[%s1 + $0x9a0] sm:$0xff]
  %v335 = vld [vmem:[%s1 + $0x9a8] sm:$0xff]
  %v336 = vld [vmem:[%s1 + $0x9b0] sm:$0xff]
  %v337 = vld [vmem:[%s1 + $0x9b8] sm:$0xff]
  %v338 = vld [vmem:[%s1 + $0x9c0] sm:$0xff]
  %v339 = vld [vmem:[%s1 + $0x9c8] sm:$0xff]
  %v340 = vld [vmem:[%s1 + $0x9d0] sm:$0xff]
  %v341 = vld [vmem:[%s1 + $0x9d8] sm:$0xff]
  %v342 = vld [vmem:[%s1 + $0x9e0] sm:$0xff]
  %v343 = vld [vmem:[%s1 + $0x9e8] sm:$0xff]
  %v344 = vld [vmem:[%s1 + $0x9f0] sm:$0xff]
  %v345 = vld [vmem:[%s1 + $0x9f8] sm:$0xff]
  %v346 = vld [vmem:[%s1 + $0xa00] sm:$0xff]
  %v347 = vld [vmem:[%s1 + $0xa08] sm:$0xff]
  %v348 = vld [vmem:[%s1 + $0xa10] sm:$0xff]
  %v349 = vld [vmem:[%s1 + $0xa18] sm:$0xff]
  %v350 = vld [vmem:[%s1 + $0xa20] sm:$0xff]
  %v351 = vld [vmem:[%s1 + $0xa28] sm:$0xff]
  %v352 = vld [vmem:[%s1 + $0xa30] sm:$0xff]
  %v353 = vld [vmem:[%s1 + $0xa38] sm:$0xff]
  %v354 = vld [vmem:[%s1 + $0xa40] sm:$0xff]
  %v355 = vld [vmem:[%s1 + $0xa48] sm:$0xff]
  %v356 = vld [vmem:[%s1 + $0xa50] sm:$0xff]
  %v357 = vld [vmem:[%s1 + $0xa58] sm:$0xff]
  %v358 = vld [vmem:[%s1 + $0xa60] sm:$0xff]
  %v359 = vld [vmem:[%s1 + $0xa68] sm:$0xff]
  %v360 = vld [vmem:[%s1 + $0xa70] sm:$0xff]
  %v361 = vld [vmem:[%s1 + $0xa78] sm:$0xff]
  %v362 = vld [vmem:[%s1 + $0xa80] sm:$0xff]
  %v363 = vld [vmem:[%s1 + $0xa88] sm:$0xff]
  %v364 = vld [vmem:[%s1 + $0xa90] sm:$0xff]
  %v365 = vld [vmem:[%s1 + $0xa98] sm:$0xff]
  %v366 = vld [vmem:[%s1 + $0xaa0] sm:$0xff]
  %v367 = vld [vmem:[%s1 + $0xaa8] sm:$0xff]
  %v368 = vld [vmem:[%s1 + $0xab0] sm:$0xff]
  %v369 = vld [vmem:[%s1 + $0xab8] sm:$0xff]
  %v370 = vld [vmem:[%s1 + $0xac0] sm:$0xff]
  %v371 = vld [vmem:[%s1 + $0xac8] sm:$0xff]
  %v372 = vld [vmem:[%s1 + $0xad0] sm:$0xff]
  %v373 = vld [vmem:[%s1 + $0xad8] sm:$0xff]
  %v374 = vld [vmem:[%s1 + $0xae0] sm:$0xff]
  %v375 = vld [vmem:[%s1 + $0xae8] sm:$0xff]
  %v376 = vld [vmem:[%s1 + $0xaf0] sm:$0xff]
  %v377 = vld [vmem:[%s1 + $0xaf8] sm:$0xff]
  %v378 = vld [vmem:[%s1 + $0xb00] sm:$0xff]
  %v379 = vld [vmem:[%s1 + $0xb08] sm:$0xff]
  %v380 = vld [vmem:[%s1 + $0xb10] sm:$0xff]
  %v381 = vld [vmem:[%s1 + $0xb18] sm:$0xff]
  %v382 = vld [vmem:[%s1 + $0xb20] sm:$0xff]
  %v383 = vld [vmem:[%s1 + $0xb28] sm:$0xff]
  %v384 = vld [vmem:[%s1 + $0xb30] sm:$0xff]
  %v385 = vld [vmem:[%s1 + $0xb38] sm:$0xff]
  %v386 = vld [vmem:[%s1 + $0xb40] sm:$0xff]
  %v387 = vld [vmem:[%s1 + $0xb48] sm:$0xff]
  %v388 = vld [vmem:[%s1 + $0xb50] sm:$0xff]
  %v389 = vld [vmem:[%s1 + $0xb58] sm:$0xff]
  %v390 = vld [vmem:[%s1 + $0xb60] sm:$0xff]
  %v391 = vld [vmem:[%s1 + $0xb68] sm:$0xff]
  %v392 = vld [vmem:[%s1 + $0xb70] sm:$0xff]
  %v393 = vld [vmem:[%s1 + $0xb78] sm:$0xff]
  %v394 = vld [vmem:[%s1 + $0xb80] sm:$0xff]
  %v395 = vld [vmem:[%s1 + $0xb88] sm:$0xff]
  %v396 = vld [vmem:[%s1 + $0xb90] sm:$0xff]
  %v397 = vld [vmem:[%s1 + $0xb98] sm:$0xff]
  %v398 = vld [vmem:[%s1 + $0xba0] sm:$0xff]
  %v399 = vld [vmem:[%s1 + $0xba8] sm:$0xff]
  %v400 = vld [vmem:[%s1 + $0xbb0] sm:$0xff]
  %v401 = vld [vmem:[%s1 + $0xbb8] sm:$0xff]
  %v402 = vld [vmem:[%s1 + $0xbc0] sm:$0xff]
  %v403 = vld [vmem:[%s1 + $0xbc8] sm:$0xff]
  %v404 = vld [vmem:[%s1 + $0xbd0] sm:$0xff]
  %v405 = vld [vmem:[%s1 + $0xbd8] sm:$0xff]
  %v406 = vld [vmem:[%s1 + $0xbe0] sm:$0xff]
  %v407 = vld [vmem:[%s1 + $0xbe8] sm:$0xff]
  %v408 = vld [vmem:[%s1 + $0xbf0] sm:$0xff]
  %v409 = vld [vmem:[%s1 + $0xbf8] sm:$0xff]
  %v410 = vld [vmem:[%s2] sm:$0xf]
  %v412 = vlaneseq
  %v413 = vshrl.u32 %v412, 7
  %v414 = vsub.s32 0, %v413
  %v415 = vrot.slane %v410, %v414
  %v416 = vlaneseq
  %v417 = vshrl.u32 %v416, 7
  %v418 = vsub.s32 1, %v417
  %v419 = vrot.slane %v410, %v418
  %v420 = vlaneseq
  %v421 = vshrl.u32 %v420, 7
  %v422 = vsub.s32 2, %v421
  %v423 = vrot.slane %v410, %v422
  %v424 = vlaneseq
  %v425 = vshrl.u32 %v424, 7
  %v426 = vsub.s32 3, %v425
  %v427 = vrot.slane %v410, %v426
  %v438 = vunpack.c.l.b16 %v20
  %v439 = vunpack.c.h.b16 %v20
  %v440 = vunpack.c.l.b16 %v21
  %v441 = vunpack.c.h.b16 %v21
  %v442 = vunpack.c.l.b16 %v22
  %v443 = vunpack.c.h.b16 %v22
  %v444 = vunpack.c.l.b16 %v23
  %v445 = vunpack.c.h.b16 %v23
  %v446 = vunpack.c.l.b16 %v24
  %v447 = vunpack.c.h.b16 %v24
  %v448 = vunpack.c.l.b16 %v25
  %v449 = vunpack.c.h.b16 %v25
  %v450 = vpack.c.b16 %v438, %v438
  %v451 = vpack.c.b16 %v439, %v439
  %v452 = vpack.c.b16 %v440, %v440
  %v453 = vpack.c.b16 %v441, %v441
  %v454 = vpack.c.b16 %v442, %v442
  %v455 = vpack.c.b16 %v443, %v443
  %v456 = vpack.c.b16 %v444, %v444
  %v457 = vpack.c.b16 %v445, %v445
  %v458 = vpack.c.b16 %v446, %v446
  %v459 = vpack.c.b16 %v447, %v447
  %v460 = vpack.c.b16 %v448, %v448
  %v461 = vpack.c.b16 %v449, %v449
  %v858 = vunpack.c.l.b16 %v26
  %v859 = vunpack.c.h.b16 %v26
  %v860 = vunpack.c.l.b16 %v27
  %v861 = vunpack.c.h.b16 %v27
  %v862 = vunpack.c.l.b16 %v28
  %v863 = vunpack.c.h.b16 %v28
  %v864 = vunpack.c.l.b16 %v29
  %v865 = vunpack.c.h.b16 %v29
  %v866 = vunpack.c.l.b16 %v30
  %v867 = vunpack.c.h.b16 %v30
  %v868 = vunpack.c.l.b16 %v31
  %v869 = vunpack.c.h.b16 %v31
  %v870 = vunpack.c.l.b16 %v32
  %v871 = vunpack.c.h.b16 %v32
  %v872 = vunpack.c.l.b16 %v33
  %v873 = vunpack.c.h.b16 %v33
  %v874 = vunpack.c.l.b16 %v34
  %v875 = vunpack.c.h.b16 %v34
  %v876 = vunpack.c.l.b16 %v35
  %v877 = vunpack.c.h.b16 %v35
  %v878 = vunpack.c.l.b16 %v36
  %v879 = vunpack.c.h.b16 %v36
  %v880 = vunpack.c.l.b16 %v37
  %v881 = vunpack.c.h.b16 %v37
  %v882 = vunpack.c.l.b16 %v38
  %v883 = vunpack.c.h.b16 %v38
  %v884 = vunpack.c.l.b16 %v39
  %v885 = vunpack.c.h.b16 %v39
  %v886 = vunpack.c.l.b16 %v40
  %v887 = vunpack.c.h.b16 %v40
  %v888 = vunpack.c.l.b16 %v41
  %v889 = vunpack.c.h.b16 %v41
  %v890 = vunpack.c.l.b16 %v42
  %v891 = vunpack.c.h.b16 %v42
  %v892 = vunpack.c.l.b16 %v43
  %v893 = vunpack.c.h.b16 %v43
  %v894 = vunpack.c.l.b16 %v44
  %v895 = vunpack.c.h.b16 %v44
  %v896 = vunpack.c.l.b16 %v45
  %v897 = vunpack.c.h.b16 %v45
  %v898 = vunpack.c.l.b16 %v46
  %v899 = vunpack.c.h.b16 %v46
  %v900 = vunpack.c.l.b16 %v47
  %v901 = vunpack.c.h.b16 %v47
  %v902 = vunpack.c.l.b16 %v48
  %v903 = vunpack.c.h.b16 %v48
  %v904 = vunpack.c.l.b16 %v49
  %v905 = vunpack.c.h.b16 %v49
  %v906 = vunpack.c.l.b16 %v50
  %v907 = vunpack.c.h.b16 %v50
  %v908 = vunpack.c.l.b16 %v51
  %v909 = vunpack.c.h.b16 %v51
  %v910 = vunpack.c.l.b16 %v52
  %v911 = vunpack.c.h.b16 %v52
  %v912 = vunpack.c.l.b16 %v53
  %v913 = vunpack.c.h.b16 %v53
  %v914 = vunpack.c.l.b16 %v54
  %v915 = vunpack.c.h.b16 %v54
  %v916 = vunpack.c.l.b16 %v55
  %v917 = vunpack.c.h.b16 %v55
  %v918 = vunpack.c.l.b16 %v56
  %v919 = vunpack.c.h.b16 %v56
  %v920 = vunpack.c.l.b16 %v57
  %v921 = vunpack.c.h.b16 %v57
  %v922 = vunpack.c.l.b16 %v58
  %v923 = vunpack.c.h.b16 %v58
  %v924 = vunpack.c.l.b16 %v59
  %v925 = vunpack.c.h.b16 %v59
  %v926 = vunpack.c.l.b16 %v60
  %v927 = vunpack.c.h.b16 %v60
  %v928 = vunpack.c.l.b16 %v61
  %v929 = vunpack.c.h.b16 %v61
  %v930 = vunpack.c.l.b16 %v62
  %v931 = vunpack.c.h.b16 %v62
  %v932 = vunpack.c.l.b16 %v63
  %v933 = vunpack.c.h.b16 %v63
  %v934 = vunpack.c.l.b16 %v64
  %v935 = vunpack.c.h.b16 %v64
  %v936 = vunpack.c.l.b16 %v65
  %v937 = vunpack.c.h.b16 %v65
  %v938 = vunpack.c.l.b16 %v66
  %v939 = vunpack.c.h.b16 %v66
  %v940 = vunpack.c.l.b16 %v67
  %v941 = vunpack.c.h.b16 %v67
  %v942 = vunpack.c.l.b16 %v68
  %v943 = vunpack.c.h.b16 %v68
  %v944 = vunpack.c.l.b16 %v69
  %v945 = vunpack.c.h.b16 %v69
  %v946 = vunpack.c.l.b16 %v70
  %v947 = vunpack.c.h.b16 %v70
  %v948 = vunpack.c.l.b16 %v71
  %v949 = vunpack.c.h.b16 %v71
  %v950 = vunpack.c.l.b16 %v72
  %v951 = vunpack.c.h.b16 %v72
  %v952 = vunpack.c.l.b16 %v73
  %v953 = vunpack.c.h.b16 %v73
  %v954 = vunpack.c.l.b16 %v74
  %v955 = vunpack.c.h.b16 %v74
  %v956 = vunpack.c.l.b16 %v75
  %v957 = vunpack.c.h.b16 %v75
  %v958 = vunpack.c.l.b16 %v76
  %v959 = vunpack.c.h.b16 %v76
  %v960 = vunpack.c.l.b16 %v77
  %v961 = vunpack.c.h.b16 %v77
  %v962 = vunpack.c.l.b16 %v78
  %v963 = vunpack.c.h.b16 %v78
  %v964 = vunpack.c.l.b16 %v79
  %v965 = vunpack.c.h.b16 %v79
  %v966 = vunpack.c.l.b16 %v80
  %v967 = vunpack.c.h.b16 %v80
  %v968 = vunpack.c.l.b16 %v81
  %v969 = vunpack.c.h.b16 %v81
  %v970 = vunpack.c.l.b16 %v82
  %v971 = vunpack.c.h.b16 %v82
  %v972 = vunpack.c.l.b16 %v83
  %v973 = vunpack.c.h.b16 %v83
  %v974 = vunpack.c.l.b16 %v84
  %v975 = vunpack.c.h.b16 %v84
  %v976 = vunpack.c.l.b16 %v85
  %v977 = vunpack.c.h.b16 %v85
  %v978 = vunpack.c.l.b16 %v86
  %v979 = vunpack.c.h.b16 %v86
  %v980 = vunpack.c.l.b16 %v87
  %v981 = vunpack.c.h.b16 %v87
  %v982 = vunpack.c.l.b16 %v88
  %v983 = vunpack.c.h.b16 %v88
  %v984 = vunpack.c.l.b16 %v89
  %v985 = vunpack.c.h.b16 %v89
  %v986 = vunpack.c.l.b16 %v90
  %v987 = vunpack.c.h.b16 %v90
  %v988 = vunpack.c.l.b16 %v91
  %v989 = vunpack.c.h.b16 %v91
  %v990 = vunpack.c.l.b16 %v92
  %v991 = vunpack.c.h.b16 %v92
  %v992 = vunpack.c.l.b16 %v93
  %v993 = vunpack.c.h.b16 %v93
  %v994 = vunpack.c.l.b16 %v94
  %v995 = vunpack.c.h.b16 %v94
  %v996 = vunpack.c.l.b16 %v95
  %v997 = vunpack.c.h.b16 %v95
  %v998 = vunpack.c.l.b16 %v96
  %v999 = vunpack.c.h.b16 %v96
  %v1000 = vunpack.c.l.b16 %v97
  %v1001 = vunpack.c.h.b16 %v97
  %v1002 = vunpack.c.l.b16 %v98
  %v1003 = vunpack.c.h.b16 %v98
  %v1004 = vunpack.c.l.b16 %v99
  %v1005 = vunpack.c.h.b16 %v99
  %v1006 = vunpack.c.l.b16 %v100
  %v1007 = vunpack.c.h.b16 %v100
  %v1008 = vunpack.c.l.b16 %v101
  %v1009 = vunpack.c.h.b16 %v101
  %v1010 = vunpack.c.l.b16 %v102
  %v1011 = vunpack.c.h.b16 %v102
  %v1012 = vunpack.c.l.b16 %v103
  %v1013 = vunpack.c.h.b16 %v103
  %v1014 = vunpack.c.l.b16 %v104
  %v1015 = vunpack.c.h.b16 %v104
  %v1016 = vunpack.c.l.b16 %v105
  %v1017 = vunpack.c.h.b16 %v105
  %v1018 = vunpack.c.l.b16 %v106
  %v1019 = vunpack.c.h.b16 %v106
  %v1020 = vunpack.c.l.b16 %v107
  %v1021 = vunpack.c.h.b16 %v107
  %v1022 = vunpack.c.l.b16 %v108
  %v1023 = vunpack.c.h.b16 %v108
  %v1024 = vunpack.c.l.b16 %v109
  %v1025 = vunpack.c.h.b16 %v109
  %v1026 = vunpack.c.l.b16 %v110
  %v1027 = vunpack.c.h.b16 %v110
  %v1028 = vunpack.c.l.b16 %v111
  %v1029 = vunpack.c.h.b16 %v111
  %v1030 = vunpack.c.l.b16 %v112
  %v1031 = vunpack.c.h.b16 %v112
  %v1032 = vunpack.c.l.b16 %v113
  %v1033 = vunpack.c.h.b16 %v113
  %v1034 = vunpack.c.l.b16 %v114
  %v1035 = vunpack.c.h.b16 %v114
  %v1036 = vunpack.c.l.b16 %v115
  %v1037 = vunpack.c.h.b16 %v115
  %v1038 = vunpack.c.l.b16 %v116
  %v1039 = vunpack.c.h.b16 %v116
  %v1040 = vunpack.c.l.b16 %v117
  %v1041 = vunpack.c.h.b16 %v117
  %v1042 = vunpack.c.l.b16 %v118
  %v1043 = vunpack.c.h.b16 %v118
  %v1044 = vunpack.c.l.b16 %v119
  %v1045 = vunpack.c.h.b16 %v119
  %v1046 = vunpack.c.l.b16 %v120
  %v1047 = vunpack.c.h.b16 %v120
  %v1048 = vunpack.c.l.b16 %v121
  %v1049 = vunpack.c.h.b16 %v121
  %v1050 = vunpack.c.l.b16 %v122
  %v1051 = vunpack.c.h.b16 %v122
  %v1052 = vunpack.c.l.b16 %v123
  %v1053 = vunpack.c.h.b16 %v123
  %v1054 = vunpack.c.l.b16 %v124
  %v1055 = vunpack.c.h.b16 %v124
  %v1056 = vunpack.c.l.b16 %v125
  %v1057 = vunpack.c.h.b16 %v125
  %v1058 = vunpack.c.l.b16 %v126
  %v1059 = vunpack.c.h.b16 %v126
  %v1060 = vunpack.c.l.b16 %v127
  %v1061 = vunpack.c.h.b16 %v127
  %v1062 = vunpack.c.l.b16 %v128
  %v1063 = vunpack.c.h.b16 %v128
  %v1064 = vunpack.c.l.b16 %v129
  %v1065 = vunpack.c.h.b16 %v129
  %v1066 = vunpack.c.l.b16 %v130
  %v1067 = vunpack.c.h.b16 %v130
  %v1068 = vunpack.c.l.b16 %v131
  %v1069 = vunpack.c.h.b16 %v131
  %v1070 = vunpack.c.l.b16 %v132
  %v1071 = vunpack.c.h.b16 %v132
  %v1072 = vunpack.c.l.b16 %v133
  %v1073 = vunpack.c.h.b16 %v133
  %v1074 = vunpack.c.l.b16 %v134
  %v1075 = vunpack.c.h.b16 %v134
  %v1076 = vunpack.c.l.b16 %v135
  %v1077 = vunpack.c.h.b16 %v135
  %v1078 = vunpack.c.l.b16 %v136
  %v1079 = vunpack.c.h.b16 %v136
  %v1080 = vunpack.c.l.b16 %v137
  %v1081 = vunpack.c.h.b16 %v137
  %v1082 = vunpack.c.l.b16 %v138
  %v1083 = vunpack.c.h.b16 %v138
  %v1084 = vunpack.c.l.b16 %v139
  %v1085 = vunpack.c.h.b16 %v139
  %v1086 = vunpack.c.l.b16 %v140
  %v1087 = vunpack.c.h.b16 %v140
  %v1088 = vunpack.c.l.b16 %v141
  %v1089 = vunpack.c.h.b16 %v141
  %v1090 = vunpack.c.l.b16 %v142
  %v1091 = vunpack.c.h.b16 %v142
  %v1092 = vunpack.c.l.b16 %v143
  %v1093 = vunpack.c.h.b16 %v143
  %v1094 = vunpack.c.l.b16 %v144
  %v1095 = vunpack.c.h.b16 %v144
  %v1096 = vunpack.c.l.b16 %v145
  %v1097 = vunpack.c.h.b16 %v145
  %v1098 = vunpack.c.l.b16 %v146
  %v1099 = vunpack.c.h.b16 %v146
  %v1100 = vunpack.c.l.b16 %v147
  %v1101 = vunpack.c.h.b16 %v147
  %v1102 = vunpack.c.l.b16 %v148
  %v1103 = vunpack.c.h.b16 %v148
  %v1104 = vunpack.c.l.b16 %v149
  %v1105 = vunpack.c.h.b16 %v149
  %v1106 = vunpack.c.l.b16 %v150
  %v1107 = vunpack.c.h.b16 %v150
  %v1108 = vunpack.c.l.b16 %v151
  %v1109 = vunpack.c.h.b16 %v151
  %v1110 = vunpack.c.l.b16 %v152
  %v1111 = vunpack.c.h.b16 %v152
  %v1112 = vunpack.c.l.b16 %v153
  %v1113 = vunpack.c.h.b16 %v153
  %v1114 = vunpack.c.l.b16 %v154
  %v1115 = vunpack.c.h.b16 %v154
  %v1116 = vunpack.c.l.b16 %v155
  %v1117 = vunpack.c.h.b16 %v155
  %v1118 = vunpack.c.l.b16 %v156
  %v1119 = vunpack.c.h.b16 %v156
  %v1120 = vunpack.c.l.b16 %v157
  %v1121 = vunpack.c.h.b16 %v157
  %v1122 = vunpack.c.l.b16 %v158
  %v1123 = vunpack.c.h.b16 %v158
  %v1124 = vunpack.c.l.b16 %v159
  %v1125 = vunpack.c.h.b16 %v159
  %v1126 = vunpack.c.l.b16 %v160
  %v1127 = vunpack.c.h.b16 %v160
  %v1128 = vunpack.c.l.b16 %v161
  %v1129 = vunpack.c.h.b16 %v161
  %v1130 = vunpack.c.l.b16 %v162
  %v1131 = vunpack.c.h.b16 %v162
  %v1132 = vunpack.c.l.b16 %v163
  %v1133 = vunpack.c.h.b16 %v163
  %v1134 = vunpack.c.l.b16 %v164
  %v1135 = vunpack.c.h.b16 %v164
  %v1136 = vunpack.c.l.b16 %v165
  %v1137 = vunpack.c.h.b16 %v165
  %v1138 = vunpack.c.l.b16 %v166
  %v1139 = vunpack.c.h.b16 %v166
  %v1140 = vunpack.c.l.b16 %v167
  %v1141 = vunpack.c.h.b16 %v167
  %v1142 = vunpack.c.l.b16 %v168
  %v1143 = vunpack.c.h.b16 %v168
  %v1144 = vunpack.c.l.b16 %v169
  %v1145 = vunpack.c.h.b16 %v169
  %v1146 = vunpack.c.l.b16 %v170
  %v1147 = vunpack.c.h.b16 %v170
  %v1148 = vunpack.c.l.b16 %v171
  %v1149 = vunpack.c.h.b16 %v171
  %v1150 = vunpack.c.l.b16 %v172
  %v1151 = vunpack.c.h.b16 %v172
  %v1152 = vunpack.c.l.b16 %v173
  %v1153 = vunpack.c.h.b16 %v173
  %v1154 = vunpack.c.l.b16 %v174
  %v1155 = vunpack.c.h.b16 %v174
  %v1156 = vunpack.c.l.b16 %v175
  %v1157 = vunpack.c.h.b16 %v175
  %v1158 = vunpack.c.l.b16 %v176
  %v1159 = vunpack.c.h.b16 %v176
  %v1160 = vunpack.c.l.b16 %v177
  %v1161 = vunpack.c.h.b16 %v177
  %v1162 = vunpack.c.l.b16 %v178
  %v1163 = vunpack.c.h.b16 %v178
  %v1164 = vunpack.c.l.b16 %v179
  %v1165 = vunpack.c.h.b16 %v179
  %v1166 = vunpack.c.l.b16 %v180
  %v1167 = vunpack.c.h.b16 %v180
  %v1168 = vunpack.c.l.b16 %v181
  %v1169 = vunpack.c.h.b16 %v181
  %v1170 = vunpack.c.l.b16 %v182
  %v1171 = vunpack.c.h.b16 %v182
  %v1172 = vunpack.c.l.b16 %v183
  %v1173 = vunpack.c.h.b16 %v183
  %v1174 = vunpack.c.l.b16 %v184
  %v1175 = vunpack.c.h.b16 %v184
  %v1176 = vunpack.c.l.b16 %v185
  %v1177 = vunpack.c.h.b16 %v185
  %v1178 = vunpack.c.l.b16 %v186
  %v1179 = vunpack.c.h.b16 %v186
  %v1180 = vunpack.c.l.b16 %v187
  %v1181 = vunpack.c.h.b16 %v187
  %v1182 = vunpack.c.l.b16 %v188
  %v1183 = vunpack.c.h.b16 %v188
  %v1184 = vunpack.c.l.b16 %v189
  %v1185 = vunpack.c.h.b16 %v189
  %v1186 = vunpack.c.l.b16 %v190
  %v1187 = vunpack.c.h.b16 %v190
  %v1188 = vunpack.c.l.b16 %v191
  %v1189 = vunpack.c.h.b16 %v191
  %v1190 = vunpack.c.l.b16 %v192
  %v1191 = vunpack.c.h.b16 %v192
  %v1192 = vunpack.c.l.b16 %v193
  %v1193 = vunpack.c.h.b16 %v193
  %v1194 = vunpack.c.l.b16 %v194
  %v1195 = vunpack.c.h.b16 %v194
  %v1196 = vunpack.c.l.b16 %v195
  %v1197 = vunpack.c.h.b16 %v195
  %v1198 = vunpack.c.l.b16 %v196
  %v1199 = vunpack.c.h.b16 %v196
  %v1200 = vunpack.c.l.b16 %v197
  %v1201 = vunpack.c.h.b16 %v197
  %v1202 = vunpack.c.l.b16 %v198
  %v1203 = vunpack.c.h.b16 %v198
  %v1204 = vunpack.c.l.b16 %v199
  %v1205 = vunpack.c.h.b16 %v199
  %v1206 = vunpack.c.l.b16 %v200
  %v1207 = vunpack.c.h.b16 %v200
  %v1208 = vunpack.c.l.b16 %v201
  %v1209 = vunpack.c.h.b16 %v201
  %v1210 = vunpack.c.l.b16 %v202
  %v1211 = vunpack.c.h.b16 %v202
  %v1212 = vunpack.c.l.b16 %v203
  %v1213 = vunpack.c.h.b16 %v203
  %v1214 = vunpack.c.l.b16 %v204
  %v1215 = vunpack.c.h.b16 %v204
  %v1216 = vunpack.c.l.b16 %v205
  %v1217 = vunpack.c.h.b16 %v205
  %v1218 = vunpack.c.l.b16 %v206
  %v1219 = vunpack.c.h.b16 %v206
  %v1220 = vunpack.c.l.b16 %v207
  %v1221 = vunpack.c.h.b16 %v207
  %v1222 = vunpack.c.l.b16 %v208
  %v1223 = vunpack.c.h.b16 %v208
  %v1224 = vunpack.c.l.b16 %v209
  %v1225 = vunpack.c.h.b16 %v209
  %v1226 = vunpack.c.l.b16 %v210
  %v1227 = vunpack.c.h.b16 %v210
  %v1228 = vunpack.c.l.b16 %v211
  %v1229 = vunpack.c.h.b16 %v211
  %v1230 = vunpack.c.l.b16 %v212
  %v1231 = vunpack.c.h.b16 %v212
  %v1232 = vunpack.c.l.b16 %v213
  %v1233 = vunpack.c.h.b16 %v213
  %v1234 = vunpack.c.l.b16 %v214
  %v1235 = vunpack.c.h.b16 %v214
  %v1236 = vunpack.c.l.b16 %v215
  %v1237 = vunpack.c.h.b16 %v215
  %v1238 = vunpack.c.l.b16 %v216
  %v1239 = vunpack.c.h.b16 %v216
  %v1240 = vunpack.c.l.b16 %v217
  %v1241 = vunpack.c.h.b16 %v217
  %v1242 = vunpack.c.l.b16 %v218
  %v1243 = vunpack.c.h.b16 %v218
  %v1244 = vunpack.c.l.b16 %v219
  %v1245 = vunpack.c.h.b16 %v219
  %v1246 = vunpack.c.l.b16 %v220
  %v1247 = vunpack.c.h.b16 %v220
  %v1248 = vunpack.c.l.b16 %v221
  %v1249 = vunpack.c.h.b16 %v221
  %v1250 = vunpack.c.l.b16 %v222
  %v1251 = vunpack.c.h.b16 %v222
  %v1252 = vunpack.c.l.b16 %v223
  %v1253 = vunpack.c.h.b16 %v223
  %v1254 = vunpack.c.l.b16 %v224
  %v1255 = vunpack.c.h.b16 %v224
  %v1256 = vunpack.c.l.b16 %v225
  %v1257 = vunpack.c.h.b16 %v225
  %v1258 = vunpack.c.l.b16 %v226
  %v1259 = vunpack.c.h.b16 %v226
  %v1260 = vunpack.c.l.b16 %v227
  %v1261 = vunpack.c.h.b16 %v227
  %v1262 = vunpack.c.l.b16 %v228
  %v1263 = vunpack.c.h.b16 %v228
  %v1264 = vunpack.c.l.b16 %v229
  %v1265 = vunpack.c.h.b16 %v229
  %v1266 = vunpack.c.l.b16 %v230
  %v1267 = vunpack.c.h.b16 %v230
  %v1268 = vunpack.c.l.b16 %v231
  %v1269 = vunpack.c.h.b16 %v231
  %v1270 = vunpack.c.l.b16 %v232
  %v1271 = vunpack.c.h.b16 %v232
  %v1272 = vunpack.c.l.b16 %v233
  %v1273 = vunpack.c.h.b16 %v233
  %v1274 = vunpack.c.l.b16 %v234
  %v1275 = vunpack.c.h.b16 %v234
  %v1276 = vunpack.c.l.b16 %v235
  %v1277 = vunpack.c.h.b16 %v235
  %v1278 = vunpack.c.l.b16 %v236
  %v1279 = vunpack.c.h.b16 %v236
  %v1280 = vunpack.c.l.b16 %v237
  %v1281 = vunpack.c.h.b16 %v237
  %v1282 = vunpack.c.l.b16 %v238
  %v1283 = vunpack.c.h.b16 %v238
  %v1284 = vunpack.c.l.b16 %v239
  %v1285 = vunpack.c.h.b16 %v239
  %v1286 = vunpack.c.l.b16 %v240
  %v1287 = vunpack.c.h.b16 %v240
  %v1288 = vunpack.c.l.b16 %v241
  %v1289 = vunpack.c.h.b16 %v241
  %v1290 = vunpack.c.l.b16 %v242
  %v1291 = vunpack.c.h.b16 %v242
  %v1292 = vunpack.c.l.b16 %v243
  %v1293 = vunpack.c.h.b16 %v243
  %v1294 = vunpack.c.l.b16 %v244
  %v1295 = vunpack.c.h.b16 %v244
  %v1296 = vunpack.c.l.b16 %v245
  %v1297 = vunpack.c.h.b16 %v245
  %v1298 = vunpack.c.l.b16 %v246
  %v1299 = vunpack.c.h.b16 %v246
  %v1300 = vunpack.c.l.b16 %v247
  %v1301 = vunpack.c.h.b16 %v247
  %v1302 = vunpack.c.l.b16 %v248
  %v1303 = vunpack.c.h.b16 %v248
  %v1304 = vunpack.c.l.b16 %v249
  %v1305 = vunpack.c.h.b16 %v249
  %v1306 = vunpack.c.l.b16 %v250
  %v1307 = vunpack.c.h.b16 %v250
  %v1308 = vunpack.c.l.b16 %v251
  %v1309 = vunpack.c.h.b16 %v251
  %v1310 = vunpack.c.l.b16 %v252
  %v1311 = vunpack.c.h.b16 %v252
  %v1312 = vunpack.c.l.b16 %v253
  %v1313 = vunpack.c.h.b16 %v253
  %v1314 = vunpack.c.l.b16 %v254
  %v1315 = vunpack.c.h.b16 %v254
  %v1316 = vunpack.c.l.b16 %v255
  %v1317 = vunpack.c.h.b16 %v255
  %v1318 = vunpack.c.l.b16 %v256
  %v1319 = vunpack.c.h.b16 %v256
  %v1320 = vunpack.c.l.b16 %v257
  %v1321 = vunpack.c.h.b16 %v257
  %v1322 = vunpack.c.l.b16 %v258
  %v1323 = vunpack.c.h.b16 %v258
  %v1324 = vunpack.c.l.b16 %v259
  %v1325 = vunpack.c.h.b16 %v259
  %v1326 = vunpack.c.l.b16 %v260
  %v1327 = vunpack.c.h.b16 %v260
  %v1328 = vunpack.c.l.b16 %v261
  %v1329 = vunpack.c.h.b16 %v261
  %v1330 = vunpack.c.l.b16 %v262
  %v1331 = vunpack.c.h.b16 %v262
  %v1332 = vunpack.c.l.b16 %v263
  %v1333 = vunpack.c.h.b16 %v263
  %v1334 = vunpack.c.l.b16 %v264
  %v1335 = vunpack.c.h.b16 %v264
  %v1336 = vunpack.c.l.b16 %v265
  %v1337 = vunpack.c.h.b16 %v265
  %v1338 = vunpack.c.l.b16 %v266
  %v1339 = vunpack.c.h.b16 %v266
  %v1340 = vunpack.c.l.b16 %v267
  %v1341 = vunpack.c.h.b16 %v267
  %v1342 = vunpack.c.l.b16 %v268
  %v1343 = vunpack.c.h.b16 %v268
  %v1344 = vunpack.c.l.b16 %v269
  %v1345 = vunpack.c.h.b16 %v269
  %v1346 = vunpack.c.l.b16 %v270
  %v1347 = vunpack.c.h.b16 %v270
  %v1348 = vunpack.c.l.b16 %v271
  %v1349 = vunpack.c.h.b16 %v271
  %v1350 = vunpack.c.l.b16 %v272
  %v1351 = vunpack.c.h.b16 %v272
  %v1352 = vunpack.c.l.b16 %v273
  %v1353 = vunpack.c.h.b16 %v273
  %v1354 = vunpack.c.l.b16 %v274
  %v1355 = vunpack.c.h.b16 %v274
  %v1356 = vunpack.c.l.b16 %v275
  %v1357 = vunpack.c.h.b16 %v275
  %v1358 = vunpack.c.l.b16 %v276
  %v1359 = vunpack.c.h.b16 %v276
  %v1360 = vunpack.c.l.b16 %v277
  %v1361 = vunpack.c.h.b16 %v277
  %v1362 = vunpack.c.l.b16 %v278
  %v1363 = vunpack.c.h.b16 %v278
  %v1364 = vunpack.c.l.b16 %v279
  %v1365 = vunpack.c.h.b16 %v279
  %v1366 = vunpack.c.l.b16 %v280
  %v1367 = vunpack.c.h.b16 %v280
  %v1368 = vunpack.c.l.b16 %v281
  %v1369 = vunpack.c.h.b16 %v281
  %v1370 = vunpack.c.l.b16 %v282
  %v1371 = vunpack.c.h.b16 %v282
  %v1372 = vunpack.c.l.b16 %v283
  %v1373 = vunpack.c.h.b16 %v283
  %v1374 = vunpack.c.l.b16 %v284
  %v1375 = vunpack.c.h.b16 %v284
  %v1376 = vunpack.c.l.b16 %v285
  %v1377 = vunpack.c.h.b16 %v285
  %v1378 = vunpack.c.l.b16 %v286
  %v1379 = vunpack.c.h.b16 %v286
  %v1380 = vunpack.c.l.b16 %v287
  %v1381 = vunpack.c.h.b16 %v287
  %v1382 = vunpack.c.l.b16 %v288
  %v1383 = vunpack.c.h.b16 %v288
  %v1384 = vunpack.c.l.b16 %v289
  %v1385 = vunpack.c.h.b16 %v289
  %v1386 = vunpack.c.l.b16 %v290
  %v1387 = vunpack.c.h.b16 %v290
  %v1388 = vunpack.c.l.b16 %v291
  %v1389 = vunpack.c.h.b16 %v291
  %v1390 = vunpack.c.l.b16 %v292
  %v1391 = vunpack.c.h.b16 %v292
  %v1392 = vunpack.c.l.b16 %v293
  %v1393 = vunpack.c.h.b16 %v293
  %v1394 = vunpack.c.l.b16 %v294
  %v1395 = vunpack.c.h.b16 %v294
  %v1396 = vunpack.c.l.b16 %v295
  %v1397 = vunpack.c.h.b16 %v295
  %v1398 = vunpack.c.l.b16 %v296
  %v1399 = vunpack.c.h.b16 %v296
  %v1400 = vunpack.c.l.b16 %v297
  %v1401 = vunpack.c.h.b16 %v297
  %v1402 = vunpack.c.l.b16 %v298
  %v1403 = vunpack.c.h.b16 %v298
  %v1404 = vunpack.c.l.b16 %v299
  %v1405 = vunpack.c.h.b16 %v299
  %v1406 = vunpack.c.l.b16 %v300
  %v1407 = vunpack.c.h.b16 %v300
  %v1408 = vunpack.c.l.b16 %v301
  %v1409 = vunpack.c.h.b16 %v301
  %v1410 = vunpack.c.l.b16 %v302
  %v1411 = vunpack.c.h.b16 %v302
  %v1412 = vunpack.c.l.b16 %v303
  %v1413 = vunpack.c.h.b16 %v303
  %v1414 = vunpack.c.l.b16 %v304
  %v1415 = vunpack.c.h.b16 %v304
  %v1416 = vunpack.c.l.b16 %v305
  %v1417 = vunpack.c.h.b16 %v305
  %v1418 = vunpack.c.l.b16 %v306
  %v1419 = vunpack.c.h.b16 %v306
  %v1420 = vunpack.c.l.b16 %v307
  %v1421 = vunpack.c.h.b16 %v307
  %v1422 = vunpack.c.l.b16 %v308
  %v1423 = vunpack.c.h.b16 %v308
  %v1424 = vunpack.c.l.b16 %v309
  %v1425 = vunpack.c.h.b16 %v309
  %v1426 = vunpack.c.l.b16 %v310
  %v1427 = vunpack.c.h.b16 %v310
  %v1428 = vunpack.c.l.b16 %v311
  %v1429 = vunpack.c.h.b16 %v311
  %v1430 = vunpack.c.l.b16 %v312
  %v1431 = vunpack.c.h.b16 %v312
  %v1432 = vunpack.c.l.b16 %v313
  %v1433 = vunpack.c.h.b16 %v313
  %v1434 = vunpack.c.l.b16 %v314
  %v1435 = vunpack.c.h.b16 %v314
  %v1436 = vunpack.c.l.b16 %v315
  %v1437 = vunpack.c.h.b16 %v315
  %v1438 = vunpack.c.l.b16 %v316
  %v1439 = vunpack.c.h.b16 %v316
  %v1440 = vunpack.c.l.b16 %v317
  %v1441 = vunpack.c.h.b16 %v317
  %v1442 = vunpack.c.l.b16 %v318
  %v1443 = vunpack.c.h.b16 %v318
  %v1444 = vunpack.c.l.b16 %v319
  %v1445 = vunpack.c.h.b16 %v319
  %v1446 = vunpack.c.l.b16 %v320
  %v1447 = vunpack.c.h.b16 %v320
  %v1448 = vunpack.c.l.b16 %v321
  %v1449 = vunpack.c.h.b16 %v321
  %v1450 = vunpack.c.l.b16 %v322
  %v1451 = vunpack.c.h.b16 %v322
  %v1452 = vunpack.c.l.b16 %v323
  %v1453 = vunpack.c.h.b16 %v323
  %v1454 = vunpack.c.l.b16 %v324
  %v1455 = vunpack.c.h.b16 %v324
  %v1456 = vunpack.c.l.b16 %v325
  %v1457 = vunpack.c.h.b16 %v325
  %v1458 = vunpack.c.l.b16 %v326
  %v1459 = vunpack.c.h.b16 %v326
  %v1460 = vunpack.c.l.b16 %v327
  %v1461 = vunpack.c.h.b16 %v327
  %v1462 = vunpack.c.l.b16 %v328
  %v1463 = vunpack.c.h.b16 %v328
  %v1464 = vunpack.c.l.b16 %v329
  %v1465 = vunpack.c.h.b16 %v329
  %v1466 = vunpack.c.l.b16 %v330
  %v1467 = vunpack.c.h.b16 %v330
  %v1468 = vunpack.c.l.b16 %v331
  %v1469 = vunpack.c.h.b16 %v331
  %v1470 = vunpack.c.l.b16 %v332
  %v1471 = vunpack.c.h.b16 %v332
  %v1472 = vunpack.c.l.b16 %v333
  %v1473 = vunpack.c.h.b16 %v333
  %v1474 = vunpack.c.l.b16 %v334
  %v1475 = vunpack.c.h.b16 %v334
  %v1476 = vunpack.c.l.b16 %v335
  %v1477 = vunpack.c.h.b16 %v335
  %v1478 = vunpack.c.l.b16 %v336
  %v1479 = vunpack.c.h.b16 %v336
  %v1480 = vunpack.c.l.b16 %v337
  %v1481 = vunpack.c.h.b16 %v337
  %v1482 = vunpack.c.l.b16 %v338
  %v1483 = vunpack.c.h.b16 %v338
  %v1484 = vunpack.c.l.b16 %v339
  %v1485 = vunpack.c.h.b16 %v339
  %v1486 = vunpack.c.l.b16 %v340
  %v1487 = vunpack.c.h.b16 %v340
  %v1488 = vunpack.c.l.b16 %v341
  %v1489 = vunpack.c.h.b16 %v341
  %v1490 = vunpack.c.l.b16 %v342
  %v1491 = vunpack.c.h.b16 %v342
  %v1492 = vunpack.c.l.b16 %v343
  %v1493 = vunpack.c.h.b16 %v343
  %v1494 = vunpack.c.l.b16 %v344
  %v1495 = vunpack.c.h.b16 %v344
  %v1496 = vunpack.c.l.b16 %v345
  %v1497 = vunpack.c.h.b16 %v345
  %v1498 = vunpack.c.l.b16 %v346
  %v1499 = vunpack.c.h.b16 %v346
  %v1500 = vunpack.c.l.b16 %v347
  %v1501 = vunpack.c.h.b16 %v347
  %v1502 = vunpack.c.l.b16 %v348
  %v1503 = vunpack.c.h.b16 %v348
  %v1504 = vunpack.c.l.b16 %v349
  %v1505 = vunpack.c.h.b16 %v349
  %v1506 = vunpack.c.l.b16 %v350
  %v1507 = vunpack.c.h.b16 %v350
  %v1508 = vunpack.c.l.b16 %v351
  %v1509 = vunpack.c.h.b16 %v351
  %v1510 = vunpack.c.l.b16 %v352
  %v1511 = vunpack.c.h.b16 %v352
  %v1512 = vunpack.c.l.b16 %v353
  %v1513 = vunpack.c.h.b16 %v353
  %v1514 = vunpack.c.l.b16 %v354
  %v1515 = vunpack.c.h.b16 %v354
  %v1516 = vunpack.c.l.b16 %v355
  %v1517 = vunpack.c.h.b16 %v355
  %v1518 = vunpack.c.l.b16 %v356
  %v1519 = vunpack.c.h.b16 %v356
  %v1520 = vunpack.c.l.b16 %v357
  %v1521 = vunpack.c.h.b16 %v357
  %v1522 = vunpack.c.l.b16 %v358
  %v1523 = vunpack.c.h.b16 %v358
  %v1524 = vunpack.c.l.b16 %v359
  %v1525 = vunpack.c.h.b16 %v359
  %v1526 = vunpack.c.l.b16 %v360
  %v1527 = vunpack.c.h.b16 %v360
  %v1528 = vunpack.c.l.b16 %v361
  %v1529 = vunpack.c.h.b16 %v361
  %v1530 = vunpack.c.l.b16 %v362
  %v1531 = vunpack.c.h.b16 %v362
  %v1532 = vunpack.c.l.b16 %v363
  %v1533 = vunpack.c.h.b16 %v363
  %v1534 = vunpack.c.l.b16 %v364
  %v1535 = vunpack.c.h.b16 %v364
  %v1536 = vunpack.c.l.b16 %v365
  %v1537 = vunpack.c.h.b16 %v365
  %v1538 = vunpack.c.l.b16 %v366
  %v1539 = vunpack.c.h.b16 %v366
  %v1540 = vunpack.c.l.b16 %v367
  %v1541 = vunpack.c.h.b16 %v367
  %v1542 = vunpack.c.l.b16 %v368
  %v1543 = vunpack.c.h.b16 %v368
  %v1544 = vunpack.c.l.b16 %v369
  %v1545 = vunpack.c.h.b16 %v369
  %v1546 = vunpack.c.l.b16 %v370
  %v1547 = vunpack.c.h.b16 %v370
  %v1548 = vunpack.c.l.b16 %v371
  %v1549 = vunpack.c.h.b16 %v371
  %v1550 = vunpack.c.l.b16 %v372
  %v1551 = vunpack.c.h.b16 %v372
  %v1552 = vunpack.c.l.b16 %v373
  %v1553 = vunpack.c.h.b16 %v373
  %v1554 = vunpack.c.l.b16 %v374
  %v1555 = vunpack.c.h.b16 %v374
  %v1556 = vunpack.c.l.b16 %v375
  %v1557 = vunpack.c.h.b16 %v375
  %v1558 = vunpack.c.l.b16 %v376
  %v1559 = vunpack.c.h.b16 %v376
  %v1560 = vunpack.c.l.b16 %v377
  %v1561 = vunpack.c.h.b16 %v377
  %v1562 = vunpack.c.l.b16 %v378
  %v1563 = vunpack.c.h.b16 %v378
  %v1564 = vunpack.c.l.b16 %v379
  %v1565 = vunpack.c.h.b16 %v379
  %v1566 = vunpack.c.l.b16 %v380
  %v1567 = vunpack.c.h.b16 %v380
  %v1568 = vunpack.c.l.b16 %v381
  %v1569 = vunpack.c.h.b16 %v381
  %v1570 = vunpack.c.l.b16 %v382
  %v1571 = vunpack.c.h.b16 %v382
  %v1572 = vunpack.c.l.b16 %v383
  %v1573 = vunpack.c.h.b16 %v383
  %v1574 = vunpack.c.l.b16 %v384
  %v1575 = vunpack.c.h.b16 %v384
  %v1576 = vunpack.c.l.b16 %v385
  %v1577 = vunpack.c.h.b16 %v385
  %v1578 = vunpack.c.l.b16 %v386
  %v1579 = vunpack.c.h.b16 %v386
  %v1580 = vunpack.c.l.b16 %v387
  %v1581 = vunpack.c.h.b16 %v387
  %v1582 = vunpack.c.l.b16 %v388
  %v1583 = vunpack.c.h.b16 %v388
  %v1584 = vunpack.c.l.b16 %v389
  %v1585 = vunpack.c.h.b16 %v389
  %v1586 = vunpack.c.l.b16 %v390
  %v1587 = vunpack.c.h.b16 %v390
  %v1588 = vunpack.c.l.b16 %v391
  %v1589 = vunpack.c.h.b16 %v391
  %v1590 = vunpack.c.l.b16 %v392
  %v1591 = vunpack.c.h.b16 %v392
  %v1592 = vunpack.c.l.b16 %v393
  %v1593 = vunpack.c.h.b16 %v393
  %v1594 = vunpack.c.l.b16 %v394
  %v1595 = vunpack.c.h.b16 %v394
  %v1596 = vunpack.c.l.b16 %v395
  %v1597 = vunpack.c.h.b16 %v395
  %v1598 = vunpack.c.l.b16 %v396
  %v1599 = vunpack.c.h.b16 %v396
  %v1600 = vunpack.c.l.b16 %v397
  %v1601 = vunpack.c.h.b16 %v397
  %v1602 = vunpack.c.l.b16 %v398
  %v1603 = vunpack.c.h.b16 %v398
  %v1604 = vunpack.c.l.b16 %v399
  %v1605 = vunpack.c.h.b16 %v399
  %v1606 = vunpack.c.l.b16 %v400
  %v1607 = vunpack.c.h.b16 %v400
  %v1608 = vunpack.c.l.b16 %v401
  %v1609 = vunpack.c.h.b16 %v401
  %v1610 = vunpack.c.l.b16 %v402
  %v1611 = vunpack.c.h.b16 %v402
  %v1612 = vunpack.c.l.b16 %v403
  %v1613 = vunpack.c.h.b16 %v403
  %v1614 = vunpack.c.l.b16 %v404
  %v1615 = vunpack.c.h.b16 %v404
  %v1616 = vunpack.c.l.b16 %v405
  %v1617 = vunpack.c.h.b16 %v405
  %v1618 = vunpack.c.l.b16 %v406
  %v1619 = vunpack.c.h.b16 %v406
  %v1620 = vunpack.c.l.b16 %v407
  %v1621 = vunpack.c.h.b16 %v407
  %v1622 = vunpack.c.l.b16 %v408
  %v1623 = vunpack.c.h.b16 %v408
  %v1624 = vunpack.c.l.b16 %v409
  %v1625 = vunpack.c.h.b16 %v409
  %v1626 = vpack.c.b16 %v862, %v858
  %v1627 = vpack.c.b16 %v863, %v859
  %v1628 = vpack.c.b16 %v864, %v860
  %v1629 = vpack.c.b16 %v865, %v861
  %v1630 = vpack.c.b16 %v870, %v866
  %v1631 = vpack.c.b16 %v871, %v867
  %v1632 = vpack.c.b16 %v872, %v868
  %v1633 = vpack.c.b16 %v873, %v869
  %v1634 = vpack.c.b16 %v878, %v874
  %v1635 = vpack.c.b16 %v879, %v875
  %v1636 = vpack.c.b16 %v880, %v876
  %v1637 = vpack.c.b16 %v881, %v877
  %v1638 = vpack.c.b16 %v886, %v882
  %v1639 = vpack.c.b16 %v887, %v883
  %v1640 = vpack.c.b16 %v888, %v884
  %v1641 = vpack.c.b16 %v889, %v885
  %v1642 = vpack.c.b16 %v894, %v890
  %v1643 = vpack.c.b16 %v895, %v891
  %v1644 = vpack.c.b16 %v896, %v892
  %v1645 = vpack.c.b16 %v897, %v893
  %v1646 = vpack.c.b16 %v902, %v898
  %v1647 = vpack.c.b16 %v903, %v899
  %v1648 = vpack.c.b16 %v904, %v900
  %v1649 = vpack.c.b16 %v905, %v901
  %v1650 = vpack.c.b16 %v910, %v906
  %v1651 = vpack.c.b16 %v911, %v907
  %v1652 = vpack.c.b16 %v912, %v908
  %v1653 = vpack.c.b16 %v913, %v909
  %v1654 = vpack.c.b16 %v918, %v914
  %v1655 = vpack.c.b16 %v919, %v915
  %v1656 = vpack.c.b16 %v920, %v916
  %v1657 = vpack.c.b16 %v921, %v917
  %v1658 = vpack.c.b16 %v926, %v922
  %v1659 = vpack.c.b16 %v927, %v923
  %v1660 = vpack.c.b16 %v928, %v924
  %v1661 = vpack.c.b16 %v929, %v925
  %v1662 = vpack.c.b16 %v934, %v930
  %v1663 = vpack.c.b16 %v935, %v931
  %v1664 = vpack.c.b16 %v936, %v932
  %v1665 = vpack.c.b16 %v937, %v933
  %v1666 = vpack.c.b16 %v942, %v938
  %v1667 = vpack.c.b16 %v943, %v939
  %v1668 = vpack.c.b16 %v944, %v940
  %v1669 = vpack.c.b16 %v945, %v941
  %v1670 = vpack.c.b16 %v950, %v946
  %v1671 = vpack.c.b16 %v951, %v947
  %v1672 = vpack.c.b16 %v952, %v948
  %v1673 = vpack.c.b16 %v953, %v949
  %v1674 = vpack.c.b16 %v958, %v954
  %v1675 = vpack.c.b16 %v959, %v955
  %v1676 = vpack.c.b16 %v960, %v956
  %v1677 = vpack.c.b16 %v961, %v957
  %v1678 = vpack.c.b16 %v966, %v962
  %v1679 = vpack.c.b16 %v967, %v963
  %v1680 = vpack.c.b16 %v968, %v964
  %v1681 = vpack.c.b16 %v969, %v965
  %v1682 = vpack.c.b16 %v974, %v970
  %v1683 = vpack.c.b16 %v975, %v971
  %v1684 = vpack.c.b16 %v976, %v972
  %v1685 = vpack.c.b16 %v977, %v973
  %v1686 = vpack.c.b16 %v982, %v978
  %v1687 = vpack.c.b16 %v983, %v979
  %v1688 = vpack.c.b16 %v984, %v980
  %v1689 = vpack.c.b16 %v985, %v981
  %v1690 = vpack.c.b16 %v990, %v986
  %v1691 = vpack.c.b16 %v991, %v987
  %v1692 = vpack.c.b16 %v992, %v988
  %v1693 = vpack.c.b16 %v993, %v989
  %v1694 = vpack.c.b16 %v998, %v994
  %v1695 = vpack.c.b16 %v999, %v995
  %v1696 = vpack.c.b16 %v1000, %v996
  %v1697 = vpack.c.b16 %v1001, %v997
  %v1698 = vpack.c.b16 %v1006, %v1002
  %v1699 = vpack.c.b16 %v1007, %v1003
  %v1700 = vpack.c.b16 %v1008, %v1004
  %v1701 = vpack.c.b16 %v1009, %v1005
  %v1702 = vpack.c.b16 %v1014, %v1010
  %v1703 = vpack.c.b16 %v1015, %v1011
  %v1704 = vpack.c.b16 %v1016, %v1012
  %v1705 = vpack.c.b16 %v1017, %v1013
  %v1706 = vpack.c.b16 %v1022, %v1018
  %v1707 = vpack.c.b16 %v1023, %v1019
  %v1708 = vpack.c.b16 %v1024, %v1020
  %v1709 = vpack.c.b16 %v1025, %v1021
  %v1710 = vpack.c.b16 %v1030, %v1026
  %v1711 = vpack.c.b16 %v1031, %v1027
  %v1712 = vpack.c.b16 %v1032, %v1028
  %v1713 = vpack.c.b16 %v1033, %v1029
  %v1714 = vpack.c.b16 %v1038, %v1034
  %v1715 = vpack.c.b16 %v1039, %v1035
  %v1716 = vpack.c.b16 %v1040, %v1036
  %v1717 = vpack.c.b16 %v1041, %v1037
  %v1718 = vpack.c.b16 %v1046, %v1042
  %v1719 = vpack.c.b16 %v1047, %v1043
  %v1720 = vpack.c.b16 %v1048, %v1044
  %v1721 = vpack.c.b16 %v1049, %v1045
  %v1722 = vpack.c.b16 %v1054, %v1050
  %v1723 = vpack.c.b16 %v1055, %v1051
  %v1724 = vpack.c.b16 %v1056, %v1052
  %v1725 = vpack.c.b16 %v1057, %v1053
  %v1726 = vpack.c.b16 %v1062, %v1058
  %v1727 = vpack.c.b16 %v1063, %v1059
  %v1728 = vpack.c.b16 %v1064, %v1060
  %v1729 = vpack.c.b16 %v1065, %v1061
  %v1730 = vpack.c.b16 %v1070, %v1066
  %v1731 = vpack.c.b16 %v1071, %v1067
  %v1732 = vpack.c.b16 %v1072, %v1068
  %v1733 = vpack.c.b16 %v1073, %v1069
  %v1734 = vpack.c.b16 %v1078, %v1074
  %v1735 = vpack.c.b16 %v1079, %v1075
  %v1736 = vpack.c.b16 %v1080, %v1076
  %v1737 = vpack.c.b16 %v1081, %v1077
  %v1738 = vpack.c.b16 %v1086, %v1082
  %v1739 = vpack.c.b16 %v1087, %v1083
  %v1740 = vpack.c.b16 %v1088, %v1084
  %v1741 = vpack.c.b16 %v1089, %v1085
  %v1742 = vpack.c.b16 %v1094, %v1090
  %v1743 = vpack.c.b16 %v1095, %v1091
  %v1744 = vpack.c.b16 %v1096, %v1092
  %v1745 = vpack.c.b16 %v1097, %v1093
  %v1746 = vpack.c.b16 %v1102, %v1098
  %v1747 = vpack.c.b16 %v1103, %v1099
  %v1748 = vpack.c.b16 %v1104, %v1100
  %v1749 = vpack.c.b16 %v1105, %v1101
  %v1750 = vpack.c.b16 %v1110, %v1106
  %v1751 = vpack.c.b16 %v1111, %v1107
  %v1752 = vpack.c.b16 %v1112, %v1108
  %v1753 = vpack.c.b16 %v1113, %v1109
  %v1754 = vpack.c.b16 %v1118, %v1114
  %v1755 = vpack.c.b16 %v1119, %v1115
  %v1756 = vpack.c.b16 %v1120, %v1116
  %v1757 = vpack.c.b16 %v1121, %v1117
  %v1758 = vpack.c.b16 %v1126, %v1122
  %v1759 = vpack.c.b16 %v1127, %v1123
  %v1760 = vpack.c.b16 %v1128, %v1124
  %v1761 = vpack.c.b16 %v1129, %v1125
  %v1762 = vpack.c.b16 %v1134, %v1130
  %v1763 = vpack.c.b16 %v1135, %v1131
  %v1764 = vpack.c.b16 %v1136, %v1132
  %v1765 = vpack.c.b16 %v1137, %v1133
  %v1766 = vpack.c.b16 %v1142, %v1138
  %v1767 = vpack.c.b16 %v1143, %v1139
  %v1768 = vpack.c.b16 %v1144, %v1140
  %v1769 = vpack.c.b16 %v1145, %v1141
  %v1770 = vpack.c.b16 %v1150, %v1146
  %v1771 = vpack.c.b16 %v1151, %v1147
  %v1772 = vpack.c.b16 %v1152, %v1148
  %v1773 = vpack.c.b16 %v1153, %v1149
  %v1774 = vpack.c.b16 %v1158, %v1154
  %v1775 = vpack.c.b16 %v1159, %v1155
  %v1776 = vpack.c.b16 %v1160, %v1156
  %v1777 = vpack.c.b16 %v1161, %v1157
  %v1778 = vpack.c.b16 %v1166, %v1162
  %v1779 = vpack.c.b16 %v1167, %v1163
  %v1780 = vpack.c.b16 %v1168, %v1164
  %v1781 = vpack.c.b16 %v1169, %v1165
  %v1782 = vpack.c.b16 %v1174, %v1170
  %v1783 = vpack.c.b16 %v1175, %v1171
  %v1784 = vpack.c.b16 %v1176, %v1172
  %v1785 = vpack.c.b16 %v1177, %v1173
  %v1786 = vpack.c.b16 %v1182, %v1178
  %v1787 = vpack.c.b16 %v1183, %v1179
  %v1788 = vpack.c.b16 %v1184, %v1180
  %v1789 = vpack.c.b16 %v1185, %v1181
  %v1790 = vpack.c.b16 %v1190, %v1186
  %v1791 = vpack.c.b16 %v1191, %v1187
  %v1792 = vpack.c.b16 %v1192, %v1188
  %v1793 = vpack.c.b16 %v1193, %v1189
  %v1794 = vpack.c.b16 %v1198, %v1194
  %v1795 = vpack.c.b16 %v1199, %v1195
  %v1796 = vpack.c.b16 %v1200, %v1196
  %v1797 = vpack.c.b16 %v1201, %v1197
  %v1798 = vpack.c.b16 %v1206, %v1202
  %v1799 = vpack.c.b16 %v1207, %v1203
  %v1800 = vpack.c.b16 %v1208, %v1204
  %v1801 = vpack.c.b16 %v1209, %v1205
  %v1802 = vpack.c.b16 %v1214, %v1210
  %v1803 = vpack.c.b16 %v1215, %v1211
  %v1804 = vpack.c.b16 %v1216, %v1212
  %v1805 = vpack.c.b16 %v1217, %v1213
  %v1806 = vpack.c.b16 %v1222, %v1218
  %v1807 = vpack.c.b16 %v1223, %v1219
  %v1808 = vpack.c.b16 %v1224, %v1220
  %v1809 = vpack.c.b16 %v1225, %v1221
  %v1810 = vpack.c.b16 %v1230, %v1226
  %v1811 = vpack.c.b16 %v1231, %v1227
  %v1812 = vpack.c.b16 %v1232, %v1228
  %v1813 = vpack.c.b16 %v1233, %v1229
  %v1814 = vpack.c.b16 %v1238, %v1234
  %v1815 = vpack.c.b16 %v1239, %v1235
  %v1816 = vpack.c.b16 %v1240, %v1236
  %v1817 = vpack.c.b16 %v1241, %v1237
  %v1818 = vpack.c.b16 %v1246, %v1242
  %v1819 = vpack.c.b16 %v1247, %v1243
  %v1820 = vpack.c.b16 %v1248, %v1244
  %v1821 = vpack.c.b16 %v1249, %v1245
  %v1822 = vpack.c.b16 %v1254, %v1250
  %v1823 = vpack.c.b16 %v1255, %v1251
  %v1824 = vpack.c.b16 %v1256, %v1252
  %v1825 = vpack.c.b16 %v1257, %v1253
  %v1826 = vpack.c.b16 %v1262, %v1258
  %v1827 = vpack.c.b16 %v1263, %v1259
  %v1828 = vpack.c.b16 %v1264, %v1260
  %v1829 = vpack.c.b16 %v1265, %v1261
  %v1830 = vpack.c.b16 %v1270, %v1266
  %v1831 = vpack.c.b16 %v1271, %v1267
  %v1832 = vpack.c.b16 %v1272, %v1268
  %v1833 = vpack.c.b16 %v1273, %v1269
  %v1834 = vpack.c.b16 %v1278, %v1274
  %v1835 = vpack.c.b16 %v1279, %v1275
  %v1836 = vpack.c.b16 %v1280, %v1276
  %v1837 = vpack.c.b16 %v1281, %v1277
  %v1838 = vpack.c.b16 %v1286, %v1282
  %v1839 = vpack.c.b16 %v1287, %v1283
  %v1840 = vpack.c.b16 %v1288, %v1284
  %v1841 = vpack.c.b16 %v1289, %v1285
  %v1842 = vpack.c.b16 %v1294, %v1290
  %v1843 = vpack.c.b16 %v1295, %v1291
  %v1844 = vpack.c.b16 %v1296, %v1292
  %v1845 = vpack.c.b16 %v1297, %v1293
  %v1846 = vpack.c.b16 %v1302, %v1298
  %v1847 = vpack.c.b16 %v1303, %v1299
  %v1848 = vpack.c.b16 %v1304, %v1300
  %v1849 = vpack.c.b16 %v1305, %v1301
  %v1850 = vpack.c.b16 %v1310, %v1306
  %v1851 = vpack.c.b16 %v1311, %v1307
  %v1852 = vpack.c.b16 %v1312, %v1308
  %v1853 = vpack.c.b16 %v1313, %v1309
  %v1854 = vpack.c.b16 %v1318, %v1314
  %v1855 = vpack.c.b16 %v1319, %v1315
  %v1856 = vpack.c.b16 %v1320, %v1316
  %v1857 = vpack.c.b16 %v1321, %v1317
  %v1858 = vpack.c.b16 %v1326, %v1322
  %v1859 = vpack.c.b16 %v1327, %v1323
  %v1860 = vpack.c.b16 %v1328, %v1324
  %v1861 = vpack.c.b16 %v1329, %v1325
  %v1862 = vpack.c.b16 %v1334, %v1330
  %v1863 = vpack.c.b16 %v1335, %v1331
  %v1864 = vpack.c.b16 %v1336, %v1332
  %v1865 = vpack.c.b16 %v1337, %v1333
  %v1866 = vpack.c.b16 %v1342, %v1338
  %v1867 = vpack.c.b16 %v1343, %v1339
  %v1868 = vpack.c.b16 %v1344, %v1340
  %v1869 = vpack.c.b16 %v1345, %v1341
  %v1870 = vpack.c.b16 %v1350, %v1346
  %v1871 = vpack.c.b16 %v1351, %v1347
  %v1872 = vpack.c.b16 %v1352, %v1348
  %v1873 = vpack.c.b16 %v1353, %v1349
  %v1874 = vpack.c.b16 %v1358, %v1354
  %v1875 = vpack.c.b16 %v1359, %v1355
  %v1876 = vpack.c.b16 %v1360, %v1356
  %v1877 = vpack.c.b16 %v1361, %v1357
  %v1878 = vpack.c.b16 %v1366, %v1362
  %v1879 = vpack.c.b16 %v1367, %v1363
  %v1880 = vpack.c.b16 %v1368, %v1364
  %v1881 = vpack.c.b16 %v1369, %v1365
  %v1882 = vpack.c.b16 %v1374, %v1370
  %v1883 = vpack.c.b16 %v1375, %v1371
  %v1884 = vpack.c.b16 %v1376, %v1372
  %v1885 = vpack.c.b16 %v1377, %v1373
  %v1886 = vpack.c.b16 %v1382, %v1378
  %v1887 = vpack.c.b16 %v1383, %v1379
  %v1888 = vpack.c.b16 %v1384, %v1380
  %v1889 = vpack.c.b16 %v1385, %v1381
  %v1890 = vpack.c.b16 %v1390, %v1386
  %v1891 = vpack.c.b16 %v1391, %v1387
  %v1892 = vpack.c.b16 %v1392, %v1388
  %v1893 = vpack.c.b16 %v1393, %v1389
  %v1894 = vpack.c.b16 %v1398, %v1394
  %v1895 = vpack.c.b16 %v1399, %v1395
  %v1896 = vpack.c.b16 %v1400, %v1396
  %v1897 = vpack.c.b16 %v1401, %v1397
  %v1898 = vpack.c.b16 %v1406, %v1402
  %v1899 = vpack.c.b16 %v1407, %v1403
  %v1900 = vpack.c.b16 %v1408, %v1404
  %v1901 = vpack.c.b16 %v1409, %v1405
  %v1902 = vpack.c.b16 %v1414, %v1410
  %v1903 = vpack.c.b16 %v1415, %v1411
  %v1904 = vpack.c.b16 %v1416, %v1412
  %v1905 = vpack.c.b16 %v1417, %v1413
  %v1906 = vpack.c.b16 %v1422, %v1418
  %v1907 = vpack.c.b16 %v1423, %v1419
  %v1908 = vpack.c.b16 %v1424, %v1420
  %v1909 = vpack.c.b16 %v1425, %v1421
  %v1910 = vpack.c.b16 %v1430, %v1426
  %v1911 = vpack.c.b16 %v1431, %v1427
  %v1912 = vpack.c.b16 %v1432, %v1428
  %v1913 = vpack.c.b16 %v1433, %v1429
  %v1914 = vpack.c.b16 %v1438, %v1434
  %v1915 = vpack.c.b16 %v1439, %v1435
  %v1916 = vpack.c.b16 %v1440, %v1436
  %v1917 = vpack.c.b16 %v1441, %v1437
  %v1918 = vpack.c.b16 %v1446, %v1442
  %v1919 = vpack.c.b16 %v1447, %v1443
  %v1920 = vpack.c.b16 %v1448, %v1444
  %v1921 = vpack.c.b16 %v1449, %v1445
  %v1922 = vpack.c.b16 %v1454, %v1450
  %v1923 = vpack.c.b16 %v1455, %v1451
  %v1924 = vpack.c.b16 %v1456, %v1452
  %v1925 = vpack.c.b16 %v1457, %v1453
  %v1926 = vpack.c.b16 %v1462, %v1458
  %v1927 = vpack.c.b16 %v1463, %v1459
  %v1928 = vpack.c.b16 %v1464, %v1460
  %v1929 = vpack.c.b16 %v1465, %v1461
  %v1930 = vpack.c.b16 %v1470, %v1466
  %v1931 = vpack.c.b16 %v1471, %v1467
  %v1932 = vpack.c.b16 %v1472, %v1468
  %v1933 = vpack.c.b16 %v1473, %v1469
  %v1934 = vpack.c.b16 %v1478, %v1474
  %v1935 = vpack.c.b16 %v1479, %v1475
  %v1936 = vpack.c.b16 %v1480, %v1476
  %v1937 = vpack.c.b16 %v1481, %v1477
  %v1938 = vpack.c.b16 %v1486, %v1482
  %v1939 = vpack.c.b16 %v1487, %v1483
  %v1940 = vpack.c.b16 %v1488, %v1484
  %v1941 = vpack.c.b16 %v1489, %v1485
  %v1942 = vpack.c.b16 %v1494, %v1490
  %v1943 = vpack.c.b16 %v1495, %v1491
  %v1944 = vpack.c.b16 %v1496, %v1492
  %v1945 = vpack.c.b16 %v1497, %v1493
  %v1946 = vpack.c.b16 %v1502, %v1498
  %v1947 = vpack.c.b16 %v1503, %v1499
  %v1948 = vpack.c.b16 %v1504, %v1500
  %v1949 = vpack.c.b16 %v1505, %v1501
  %v1950 = vpack.c.b16 %v1510, %v1506
  %v1951 = vpack.c.b16 %v1511, %v1507
  %v1952 = vpack.c.b16 %v1512, %v1508
  %v1953 = vpack.c.b16 %v1513, %v1509
  %v1954 = vpack.c.b16 %v1518, %v1514
  %v1955 = vpack.c.b16 %v1519, %v1515
  %v1956 = vpack.c.b16 %v1520, %v1516
  %v1957 = vpack.c.b16 %v1521, %v1517
  %v1958 = vpack.c.b16 %v1526, %v1522
  %v1959 = vpack.c.b16 %v1527, %v1523
  %v1960 = vpack.c.b16 %v1528, %v1524
  %v1961 = vpack.c.b16 %v1529, %v1525
  %v1962 = vpack.c.b16 %v1534, %v1530
  %v1963 = vpack.c.b16 %v1535, %v1531
  %v1964 = vpack.c.b16 %v1536, %v1532
  %v1965 = vpack.c.b16 %v1537, %v1533
  %v1966 = vpack.c.b16 %v1542, %v1538
  %v1967 = vpack.c.b16 %v1543, %v1539
  %v1968 = vpack.c.b16 %v1544, %v1540
  %v1969 = vpack.c.b16 %v1545, %v1541
  %v1970 = vpack.c.b16 %v1550, %v1546
  %v1971 = vpack.c.b16 %v1551, %v1547
  %v1972 = vpack.c.b16 %v1552, %v1548
  %v1973 = vpack.c.b16 %v1553, %v1549
  %v1974 = vpack.c.b16 %v1558, %v1554
  %v1975 = vpack.c.b16 %v1559, %v1555
  %v1976 = vpack.c.b16 %v1560, %v1556
  %v1977 = vpack.c.b16 %v1561, %v1557
  %v1978 = vpack.c.b16 %v1566, %v1562
  %v1979 = vpack.c.b16 %v1567, %v1563
  %v1980 = vpack.c.b16 %v1568, %v1564
  %v1981 = vpack.c.b16 %v1569, %v1565
  %v1982 = vpack.c.b16 %v1574, %v1570
  %v1983 = vpack.c.b16 %v1575, %v1571
  %v1984 = vpack.c.b16 %v1576, %v1572
  %v1985 = vpack.c.b16 %v1577, %v1573
  %v1986 = vpack.c.b16 %v1582, %v1578
  %v1987 = vpack.c.b16 %v1583, %v1579
  %v1988 = vpack.c.b16 %v1584, %v1580
  %v1989 = vpack.c.b16 %v1585, %v1581
  %v1990 = vpack.c.b16 %v1590, %v1586
  %v1991 = vpack.c.b16 %v1591, %v1587
  %v1992 = vpack.c.b16 %v1592, %v1588
  %v1993 = vpack.c.b16 %v1593, %v1589
  %v1994 = vpack.c.b16 %v1598, %v1594
  %v1995 = vpack.c.b16 %v1599, %v1595
  %v1996 = vpack.c.b16 %v1600, %v1596
  %v1997 = vpack.c.b16 %v1601, %v1597
  %v1998 = vpack.c.b16 %v1606, %v1602
  %v1999 = vpack.c.b16 %v1607, %v1603
  %v2000 = vpack.c.b16 %v1608, %v1604
  %v2001 = vpack.c.b16 %v1609, %v1605
  %v2002 = vpack.c.b16 %v1614, %v1610
  %v2003 = vpack.c.b16 %v1615, %v1611
  %v2004 = vpack.c.b16 %v1616, %v1612
  %v2005 = vpack.c.b16 %v1617, %v1613
  %v2006 = vpack.c.b16 %v1622, %v1618
  %v2007 = vpack.c.b16 %v1623, %v1619
  %v2008 = vpack.c.b16 %v1624, %v1620
  %v2009 = vpack.c.b16 %v1625, %v1621
  %2394 = vmatprep.subr.bf16.mxu0 %v1655
  %2395 = vmatpush1.bf16.msra.mxu0 %v1654
  %2396 = vmatprep.subr.bf16.mxu0 %v1651
  %2397 = vmatpush1.bf16.msra.mxu0 %v1650
  %2398 = vmatprep.subr.bf16.mxu0 %v1647
  %2399 = vmatpush1.bf16.msra.mxu0 %v1646
  %2400 = vmatprep.subr.bf16.mxu0 %v1643
  %2401 = vmatpush1.bf16.msra.mxu0 %v1642
  %2402 = vmatprep.subr.bf16.mxu0 %v1639
  %2403 = vmatpush1.bf16.msra.mxu0 %v1638
  %2404 = vmatprep.subr.bf16.mxu0 %v1635
  %2405 = vmatpush1.bf16.msra.mxu0 %v1634
  %2406 = vmatprep.subr.bf16.mxu0 %v1631
  %2407 = vmatpush1.bf16.msra.mxu0 %v1630
  %2408 = vmatprep.subr.bf16.mxu0 %v1627
  %2409 = vmatpush1.bf16.msra.mxu0 %v1626
  %2410 = vmatprep.subr.bf16.mxu0 %v1687
  %2411 = vmatpush2.bf16.msra.mxu0 %v1686
  %2412 = vmatprep.subr.bf16.mxu0 %v1683
  %2413 = vmatpush2.bf16.msra.mxu0 %v1682
  %2414 = vmatprep.subr.bf16.mxu0 %v1679
  %2415 = vmatpush2.bf16.msra.mxu0 %v1678
  %2416 = vmatprep.subr.bf16.mxu0 %v1675
  %2417 = vmatpush2.bf16.msra.mxu0 %v1674
  %2418 = vmatprep.subr.bf16.mxu0 %v1671
  %2419 = vmatpush2.bf16.msra.mxu0 %v1670
  %2420 = vmatprep.subr.bf16.mxu0 %v1667
  %2421 = vmatpush2.bf16.msra.mxu0 %v1666
  %2422 = vmatprep.subr.bf16.mxu0 %v1663
  %2423 = vmatpush2.bf16.msra.mxu0 %v1662
  %2424 = vmatprep.subr.bf16.mxu0 %v1659
  %2425 = vmatpush2.bf16.msra.mxu0 %v1658
  %2426 = vmatprep.mubr.bf16.mxu0 %v451
  %2427 = vmatmul.mubr.bf16.gmra.mxu0 %v450
  %v2428 = vpop.f32.mrf.mxu0
  %v2429 = vadd.f32 %v415, %v2428
  %v2430 = vpop.f32.mrf.mxu0
  %v2431 = vadd.f32 %v419, %v2430
  %v2432 = vpop.f32.mrf.mxu0
  %v2433 = vpop.f32.mrf.mxu0
  %2434 = vdwg.mxu0
  %2435 = vmatprep.subr.bf16.mxu0 %v1719
  %2436 = vmatpush1.bf16.msra.mxu0 %v1718
  %2437 = vmatprep.subr.bf16.mxu0 %v1715
  %2438 = vmatpush1.bf16.msra.mxu0 %v1714
  %2439 = vmatprep.subr.bf16.mxu0 %v1711
  %2440 = vmatpush1.bf16.msra.mxu0 %v1710
  %2441 = vmatprep.subr.bf16.mxu0 %v1707
  %2442 = vmatpush1.bf16.msra.mxu0 %v1706
  %2443 = vmatprep.subr.bf16.mxu0 %v1703
  %2444 = vmatpush1.bf16.msra.mxu0 %v1702
  %2445 = vmatprep.subr.bf16.mxu0 %v1699
  %2446 = vmatpush1.bf16.msra.mxu0 %v1698
  %2447 = vmatprep.subr.bf16.mxu0 %v1695
  %2448 = vmatpush1.bf16.msra.mxu0 %v1694
  %2449 = vmatprep.subr.bf16.mxu0 %v1691
  %2450 = vmatpush1.bf16.msra.mxu0 %v1690
  %2451 = vmatprep.subr.bf16.mxu0 %v1751
  %2452 = vmatpush2.bf16.msra.mxu0 %v1750
  %2453 = vmatprep.subr.bf16.mxu0 %v1747
  %2454 = vmatpush2.bf16.msra.mxu0 %v1746
  %2455 = vmatprep.subr.bf16.mxu0 %v1743
  %2456 = vmatpush2.bf16.msra.mxu0 %v1742
  %2457 = vmatprep.subr.bf16.mxu0 %v1739
  %2458 = vmatpush2.bf16.msra.mxu0 %v1738
  %2459 = vmatprep.subr.bf16.mxu0 %v1735
  %2460 = vmatpush2.bf16.msra.mxu0 %v1734
  %2461 = vmatprep.subr.bf16.mxu0 %v1731
  %2462 = vmatpush2.bf16.msra.mxu0 %v1730
  %2463 = vmatprep.subr.bf16.mxu0 %v1727
  %2464 = vmatpush2.bf16.msra.mxu0 %v1726
  %2465 = vmatprep.subr.bf16.mxu0 %v1723
  %2466 = vmatpush2.bf16.msra.mxu0 %v1722
  %2467 = vmatprep.mubr.bf16.mxu0 %v453
  %2468 = vmatmul.mubr.bf16.gmra.mxu0 %v452
  %v2469 = vpop.f32.mrf.mxu0
  %v2470 = vadd.f32 %v2429, %v2469
  %v2471 = vpop.f32.mrf.mxu0
  %v2472 = vadd.f32 %v2431, %v2471
  %v2473 = vpop.f32.mrf.mxu0
  %v2474 = vpop.f32.mrf.mxu0
  %2475 = vdwg.mxu0
  %2476 = vmatprep.subr.bf16.mxu0 %v1783
  %2477 = vmatpush1.bf16.msra.mxu0 %v1782
  %2478 = vmatprep.subr.bf16.mxu0 %v1779
  %2479 = vmatpush1.bf16.msra.mxu0 %v1778
  %2480 = vmatprep.subr.bf16.mxu0 %v1775
  %2481 = vmatpush1.bf16.msra.mxu0 %v1774
  %2482 = vmatprep.subr.bf16.mxu0 %v1771
  %2483 = vmatpush1.bf16.msra.mxu0 %v1770
  %2484 = vmatprep.subr.bf16.mxu0 %v1767
  %2485 = vmatpush1.bf16.msra.mxu0 %v1766
  %2486 = vmatprep.subr.bf16.mxu0 %v1763
  %2487 = vmatpush1.bf16.msra.mxu0 %v1762
  %2488 = vmatprep.subr.bf16.mxu0 %v1759
  %2489 = vmatpush1.bf16.msra.mxu0 %v1758
  %2490 = vmatprep.subr.bf16.mxu0 %v1755
  %2491 = vmatpush1.bf16.msra.mxu0 %v1754
  %2492 = vmatprep.subr.bf16.mxu0 %v1815
  %2493 = vmatpush2.bf16.msra.mxu0 %v1814
  %2494 = vmatprep.subr.bf16.mxu0 %v1811
  %2495 = vmatpush2.bf16.msra.mxu0 %v1810
  %2496 = vmatprep.subr.bf16.mxu0 %v1807
  %2497 = vmatpush2.bf16.msra.mxu0 %v1806
  %2498 = vmatprep.subr.bf16.mxu0 %v1803
  %2499 = vmatpush2.bf16.msra.mxu0 %v1802
  %2500 = vmatprep.subr.bf16.mxu0 %v1799
  %2501 = vmatpush2.bf16.msra.mxu0 %v1798
  %2502 = vmatprep.subr.bf16.mxu0 %v1795
  %2503 = vmatpush2.bf16.msra.mxu0 %v1794
  %2504 = vmatprep.subr.bf16.mxu0 %v1791
  %2505 = vmatpush2.bf16.msra.mxu0 %v1790
  %2506 = vmatprep.subr.bf16.mxu0 %v1787
  %2507 = vmatpush2.bf16.msra.mxu0 %v1786
  %2508 = vmatprep.mubr.bf16.mxu0 %v455
  %2509 = vmatmul.mubr.bf16.gmra.mxu0 %v454
  %v2510 = vpop.f32.mrf.mxu0
  %v2511 = vadd.f32 %v2470, %v2510
  %v2512 = vpop.f32.mrf.mxu0
  %v2513 = vadd.f32 %v2472, %v2512
  %v2514 = vpop.f32.mrf.mxu0
  %v2515 = vpop.f32.mrf.mxu0
  %2516 = vdwg.mxu0
  %2517 = vmatprep.subr.bf16.mxu0 %v1847
  %2518 = vmatpush1.bf16.msra.mxu0 %v1846
  %2519 = vmatprep.subr.bf16.mxu0 %v1843
  %2520 = vmatpush1.bf16.msra.mxu0 %v1842
  %2521 = vmatprep.subr.bf16.mxu0 %v1839
  %2522 = vmatpush1.bf16.msra.mxu0 %v1838
  %2523 = vmatprep.subr.bf16.mxu0 %v1835
  %2524 = vmatpush1.bf16.msra.mxu0 %v1834
  %2525 = vmatprep.subr.bf16.mxu0 %v1831
  %2526 = vmatpush1.bf16.msra.mxu0 %v1830
  %2527 = vmatprep.subr.bf16.mxu0 %v1827
  %2528 = vmatpush1.bf16.msra.mxu0 %v1826
  %2529 = vmatprep.subr.bf16.mxu0 %v1823
  %2530 = vmatpush1.bf16.msra.mxu0 %v1822
  %2531 = vmatprep.subr.bf16.mxu0 %v1819
  %2532 = vmatpush1.bf16.msra.mxu0 %v1818
  %2533 = vmatprep.subr.bf16.mxu0 %v1879
  %2534 = vmatpush2.bf16.msra.mxu0 %v1878
  %2535 = vmatprep.subr.bf16.mxu0 %v1875
  %2536 = vmatpush2.bf16.msra.mxu0 %v1874
  %2537 = vmatprep.subr.bf16.mxu0 %v1871
  %2538 = vmatpush2.bf16.msra.mxu0 %v1870
  %2539 = vmatprep.subr.bf16.mxu0 %v1867
  %2540 = vmatpush2.bf16.msra.mxu0 %v1866
  %2541 = vmatprep.subr.bf16.mxu0 %v1863
  %2542 = vmatpush2.bf16.msra.mxu0 %v1862
  %2543 = vmatprep.subr.bf16.mxu0 %v1859
  %2544 = vmatpush2.bf16.msra.mxu0 %v1858
  %2545 = vmatprep.subr.bf16.mxu0 %v1855
  %2546 = vmatpush2.bf16.msra.mxu0 %v1854
  %2547 = vmatprep.subr.bf16.mxu0 %v1851
  %2548 = vmatpush2.bf16.msra.mxu0 %v1850
  %2549 = vmatprep.mubr.bf16.mxu0 %v457
  %2550 = vmatmul.mubr.bf16.gmra.mxu0 %v456
  %v2551 = vpop.f32.mrf.mxu0
  %v2552 = vadd.f32 %v2511, %v2551
  %v2553 = vpop.f32.mrf.mxu0
  %v2554 = vadd.f32 %v2513, %v2553
  %v2555 = vpop.f32.mrf.mxu0
  %v2556 = vpop.f32.mrf.mxu0
  %2557 = vdwg.mxu0
  %2558 = vmatprep.subr.bf16.mxu0 %v1911
  %2559 = vmatpush1.bf16.msra.mxu0 %v1910
  %2560 = vmatprep.subr.bf16.mxu0 %v1907
  %2561 = vmatpush1.bf16.msra.mxu0 %v1906
  %2562 = vmatprep.subr.bf16.mxu0 %v1903
  %2563 = vmatpush1.bf16.msra.mxu0 %v1902
  %2564 = vmatprep.subr.bf16.mxu0 %v1899
  %2565 = vmatpush1.bf16.msra.mxu0 %v1898
  %2566 = vmatprep.subr.bf16.mxu0 %v1895
  %2567 = vmatpush1.bf16.msra.mxu0 %v1894
  %2568 = vmatprep.subr.bf16.mxu0 %v1891
  %2569 = vmatpush1.bf16.msra.mxu0 %v1890
  %2570 = vmatprep.subr.bf16.mxu0 %v1887
  %2571 = vmatpush1.bf16.msra.mxu0 %v1886
  %2572 = vmatprep.subr.bf16.mxu0 %v1883
  %2573 = vmatpush1.bf16.msra.mxu0 %v1882
  %2574 = vmatprep.subr.bf16.mxu0 %v1943
  %2575 = vmatpush2.bf16.msra.mxu0 %v1942
  %2576 = vmatprep.subr.bf16.mxu0 %v1939
  %2577 = vmatpush2.bf16.msra.mxu0 %v1938
  %2578 = vmatprep.subr.bf16.mxu0 %v1935
  %2579 = vmatpush2.bf16.msra.mxu0 %v1934
  %2580 = vmatprep.subr.bf16.mxu0 %v1931
  %2581 = vmatpush2.bf16.msra.mxu0 %v1930
  %2582 = vmatprep.subr.bf16.mxu0 %v1927
  %2583 = vmatpush2.bf16.msra.mxu0 %v1926
  %2584 = vmatprep.subr.bf16.mxu0 %v1923
  %2585 = vmatpush2.bf16.msra.mxu0 %v1922
  %2586 = vmatprep.subr.bf16.mxu0 %v1919
  %2587 = vmatpush2.bf16.msra.mxu0 %v1918
  %2588 = vmatprep.subr.bf16.mxu0 %v1915
  %2589 = vmatpush2.bf16.msra.mxu0 %v1914
  %2590 = vmatprep.mubr.bf16.mxu0 %v459
  %2591 = vmatmul.mubr.bf16.gmra.mxu0 %v458
  %v2592 = vpop.f32.mrf.mxu0
  %v2593 = vadd.f32 %v2552, %v2592
  %v2594 = vpop.f32.mrf.mxu0
  %v2595 = vadd.f32 %v2554, %v2594
  %v2596 = vpop.f32.mrf.mxu0
  %v2597 = vpop.f32.mrf.mxu0
  %2598 = vdwg.mxu0
  %2599 = vmatprep.subr.bf16.mxu0 %v1975
  %2600 = vmatpush1.bf16.msra.mxu0 %v1974
  %2601 = vmatprep.subr.bf16.mxu0 %v1971
  %2602 = vmatpush1.bf16.msra.mxu0 %v1970
  %2603 = vmatprep.subr.bf16.mxu0 %v1967
  %2604 = vmatpush1.bf16.msra.mxu0 %v1966
  %2605 = vmatprep.subr.bf16.mxu0 %v1963
  %2606 = vmatpush1.bf16.msra.mxu0 %v1962
  %2607 = vmatprep.subr.bf16.mxu0 %v1959
  %2608 = vmatpush1.bf16.msra.mxu0 %v1958
  %2609 = vmatprep.subr.bf16.mxu0 %v1955
  %2610 = vmatpush1.bf16.msra.mxu0 %v1954
  %2611 = vmatprep.subr.bf16.mxu0 %v1951
  %2612 = vmatpush1.bf16.msra.mxu0 %v1950
  %2613 = vmatprep.subr.bf16.mxu0 %v1947
  %2614 = vmatpush1.bf16.msra.mxu0 %v1946
  %2615 = vmatprep.subr.bf16.mxu0 %v2007
  %2616 = vmatpush2.bf16.msra.mxu0 %v2006
  %2617 = vmatprep.subr.bf16.mxu0 %v2003
  %2618 = vmatpush2.bf16.msra.mxu0 %v2002
  %2619 = vmatprep.subr.bf16.mxu0 %v1999
  %2620 = vmatpush2.bf16.msra.mxu0 %v1998
  %2621 = vmatprep.subr.bf16.mxu0 %v1995
  %2622 = vmatpush2.bf16.msra.mxu0 %v1994
  %2623 = vmatprep.subr.bf16.mxu0 %v1991
  %2624 = vmatpush2.bf16.msra.mxu0 %v1990
  %2625 = vmatprep.subr.bf16.mxu0 %v1987
  %2626 = vmatpush2.bf16.msra.mxu0 %v1986
  %2627 = vmatprep.subr.bf16.mxu0 %v1983
  %2628 = vmatpush2.bf16.msra.mxu0 %v1982
  %2629 = vmatprep.subr.bf16.mxu0 %v1979
  %2630 = vmatpush2.bf16.msra.mxu0 %v1978
  %2631 = vmatprep.mubr.bf16.mxu0 %v461
  %2632 = vmatmul.mubr.bf16.gmra.mxu0 %v460
  %v2633 = vpop.f32.mrf.mxu0
  %v2634 = vadd.f32 %v2593, %v2633
  %v2635 = vpop.f32.mrf.mxu0
  %v2636 = vadd.f32 %v2595, %v2635
  %v2637 = vpop.f32.mrf.mxu0
  %v2638 = vpop.f32.mrf.mxu0
  %2639 = vdwg.mxu0
  %2640 = vmatprep.subr.bf16.mxu0 %v1657
  %2641 = vmatpush1.bf16.msra.mxu0 %v1656
  %2642 = vmatprep.subr.bf16.mxu0 %v1653
  %2643 = vmatpush1.bf16.msra.mxu0 %v1652
  %2644 = vmatprep.subr.bf16.mxu0 %v1649
  %2645 = vmatpush1.bf16.msra.mxu0 %v1648
  %2646 = vmatprep.subr.bf16.mxu0 %v1645
  %2647 = vmatpush1.bf16.msra.mxu0 %v1644
  %2648 = vmatprep.subr.bf16.mxu0 %v1641
  %2649 = vmatpush1.bf16.msra.mxu0 %v1640
  %2650 = vmatprep.subr.bf16.mxu0 %v1637
  %2651 = vmatpush1.bf16.msra.mxu0 %v1636
  %2652 = vmatprep.subr.bf16.mxu0 %v1633
  %2653 = vmatpush1.bf16.msra.mxu0 %v1632
  %2654 = vmatprep.subr.bf16.mxu0 %v1629
  %2655 = vmatpush1.bf16.msra.mxu0 %v1628
  %2656 = vmatprep.subr.bf16.mxu0 %v1689
  %2657 = vmatpush2.bf16.msra.mxu0 %v1688
  %2658 = vmatprep.subr.bf16.mxu0 %v1685
  %2659 = vmatpush2.bf16.msra.mxu0 %v1684
  %2660 = vmatprep.subr.bf16.mxu0 %v1681
  %2661 = vmatpush2.bf16.msra.mxu0 %v1680
  %2662 = vmatprep.subr.bf16.mxu0 %v1677
  %2663 = vmatpush2.bf16.msra.mxu0 %v1676
  %2664 = vmatprep.subr.bf16.mxu0 %v1673
  %2665 = vmatpush2.bf16.msra.mxu0 %v1672
  %2666 = vmatprep.subr.bf16.mxu0 %v1669
  %2667 = vmatpush2.bf16.msra.mxu0 %v1668
  %2668 = vmatprep.subr.bf16.mxu0 %v1665
  %2669 = vmatpush2.bf16.msra.mxu0 %v1664
  %2670 = vmatprep.subr.bf16.mxu0 %v1661
  %2671 = vmatpush2.bf16.msra.mxu0 %v1660
  %2672 = vmatprep.mubr.bf16.mxu0 %v451
  %2673 = vmatmul.mubr.bf16.gmra.mxu0 %v450
  %v2674 = vpop.f32.mrf.mxu0
  %v2675 = vadd.f32 %v423, %v2674
  %v2676 = vpop.f32.mrf.mxu0
  %v2677 = vadd.f32 %v427, %v2676
  %v2678 = vpop.f32.mrf.mxu0
  %v2679 = vpop.f32.mrf.mxu0
  %2680 = vdwg.mxu0
  %2681 = vmatprep.subr.bf16.mxu0 %v1721
  %2682 = vmatpush1.bf16.msra.mxu0 %v1720
  %2683 = vmatprep.subr.bf16.mxu0 %v1717
  %2684 = vmatpush1.bf16.msra.mxu0 %v1716
  %2685 = vmatprep.subr.bf16.mxu0 %v1713
  %2686 = vmatpush1.bf16.msra.mxu0 %v1712
  %2687 = vmatprep.subr.bf16.mxu0 %v1709
  %2688 = vmatpush1.bf16.msra.mxu0 %v1708
  %2689 = vmatprep.subr.bf16.mxu0 %v1705
  %2690 = vmatpush1.bf16.msra.mxu0 %v1704
  %2691 = vmatprep.subr.bf16.mxu0 %v1701
  %2692 = vmatpush1.bf16.msra.mxu0 %v1700
  %2693 = vmatprep.subr.bf16.mxu0 %v1697
  %2694 = vmatpush1.bf16.msra.mxu0 %v1696
  %2695 = vmatprep.subr.bf16.mxu0 %v1693
  %2696 = vmatpush1.bf16.msra.mxu0 %v1692
  %2697 = vmatprep.subr.bf16.mxu0 %v1753
  %2698 = vmatpush2.bf16.msra.mxu0 %v1752
  %2699 = vmatprep.subr.bf16.mxu0 %v1749
  %2700 = vmatpush2.bf16.msra.mxu0 %v1748
  %2701 = vmatprep.subr.bf16.mxu0 %v1745
  %2702 = vmatpush2.bf16.msra.mxu0 %v1744
  %2703 = vmatprep.subr.bf16.mxu0 %v1741
  %2704 = vmatpush2.bf16.msra.mxu0 %v1740
  %2705 = vmatprep.subr.bf16.mxu0 %v1737
  %2706 = vmatpush2.bf16.msra.mxu0 %v1736
  %2707 = vmatprep.subr.bf16.mxu0 %v1733
  %2708 = vmatpush2.bf16.msra.mxu0 %v1732
  %2709 = vmatprep.subr.bf16.mxu0 %v1729
  %2710 = vmatpush2.bf16.msra.mxu0 %v1728
  %2711 = vmatprep.subr.bf16.mxu0 %v1725
  %2712 = vmatpush2.bf16.msra.mxu0 %v1724
  %2713 = vmatprep.mubr.bf16.mxu0 %v453
  %2714 = vmatmul.mubr.bf16.gmra.mxu0 %v452
  %v2715 = vpop.f32.mrf.mxu0
  %v2716 = vadd.f32 %v2675, %v2715
  %v2717 = vpop.f32.mrf.mxu0
  %v2718 = vadd.f32 %v2677, %v2717
  %v2719 = vpop.f32.mrf.mxu0
  %v2720 = vpop.f32.mrf.mxu0
  %2721 = vdwg.mxu0
  %2722 = vmatprep.subr.bf16.mxu0 %v1785
  %2723 = vmatpush1.bf16.msra.mxu0 %v1784
  %2724 = vmatprep.subr.bf16.mxu0 %v1781
  %2725 = vmatpush1.bf16.msra.mxu0 %v1780
  %2726 = vmatprep.subr.bf16.mxu0 %v1777
  %2727 = vmatpush1.bf16.msra.mxu0 %v1776
  %2728 = vmatprep.subr.bf16.mxu0 %v1773
  %2729 = vmatpush1.bf16.msra.mxu0 %v1772
  %2730 = vmatprep.subr.bf16.mxu0 %v1769
  %2731 = vmatpush1.bf16.msra.mxu0 %v1768
  %2732 = vmatprep.subr.bf16.mxu0 %v1765
  %2733 = vmatpush1.bf16.msra.mxu0 %v1764
  %2734 = vmatprep.subr.bf16.mxu0 %v1761
  %2735 = vmatpush1.bf16.msra.mxu0 %v1760
  %2736 = vmatprep.subr.bf16.mxu0 %v1757
  %2737 = vmatpush1.bf16.msra.mxu0 %v1756
  %2738 = vmatprep.subr.bf16.mxu0 %v1817
  %2739 = vmatpush2.bf16.msra.mxu0 %v1816
  %2740 = vmatprep.subr.bf16.mxu0 %v1813
  %2741 = vmatpush2.bf16.msra.mxu0 %v1812
  %2742 = vmatprep.subr.bf16.mxu0 %v1809
  %2743 = vmatpush2.bf16.msra.mxu0 %v1808
  %2744 = vmatprep.subr.bf16.mxu0 %v1805
  %2745 = vmatpush2.bf16.msra.mxu0 %v1804
  %2746 = vmatprep.subr.bf16.mxu0 %v1801
  %2747 = vmatpush2.bf16.msra.mxu0 %v1800
  %2748 = vmatprep.subr.bf16.mxu0 %v1797
  %2749 = vmatpush2.bf16.msra.mxu0 %v1796
  %2750 = vmatprep.subr.bf16.mxu0 %v1793
  %2751 = vmatpush2.bf16.msra.mxu0 %v1792
  %2752 = vmatprep.subr.bf16.mxu0 %v1789
  %2753 = vmatpush2.bf16.msra.mxu0 %v1788
  %2754 = vmatprep.mubr.bf16.mxu0 %v455
  %2755 = vmatmul.mubr.bf16.gmra.mxu0 %v454
  %v2756 = vpop.f32.mrf.mxu0
  %v2757 = vadd.f32 %v2716, %v2756
  %v2758 = vpop.f32.mrf.mxu0
  %v2759 = vadd.f32 %v2718, %v2758
  %v2760 = vpop.f32.mrf.mxu0
  %v2761 = vpop.f32.mrf.mxu0
  %2762 = vdwg.mxu0
  %2763 = vmatprep.subr.bf16.mxu0 %v1849
  %2764 = vmatpush1.bf16.msra.mxu0 %v1848
  %2765 = vmatprep.subr.bf16.mxu0 %v1845
  %2766 = vmatpush1.bf16.msra.mxu0 %v1844
  %2767 = vmatprep.subr.bf16.mxu0 %v1841
  %2768 = vmatpush1.bf16.msra.mxu0 %v1840
  %2769 = vmatprep.subr.bf16.mxu0 %v1837
  %2770 = vmatpush1.bf16.msra.mxu0 %v1836
  %2771 = vmatprep.subr.bf16.mxu0 %v1833
  %2772 = vmatpush1.bf16.msra.mxu0 %v1832
  %2773 = vmatprep.subr.bf16.mxu0 %v1829
  %2774 = vmatpush1.bf16.msra.mxu0 %v1828
  %2775 = vmatprep.subr.bf16.mxu0 %v1825
  %2776 = vmatpush1.bf16.msra.mxu0 %v1824
  %2777 = vmatprep.subr.bf16.mxu0 %v1821
  %2778 = vmatpush1.bf16.msra.mxu0 %v1820
  %2779 = vmatprep.subr.bf16.mxu0 %v1881
  %2780 = vmatpush2.bf16.msra.mxu0 %v1880
  %2781 = vmatprep.subr.bf16.mxu0 %v1877
  %2782 = vmatpush2.bf16.msra.mxu0 %v1876
  %2783 = vmatprep.subr.bf16.mxu0 %v1873
  %2784 = vmatpush2.bf16.msra.mxu0 %v1872
  %2785 = vmatprep.subr.bf16.mxu0 %v1869
  %2786 = vmatpush2.bf16.msra.mxu0 %v1868
  %2787 = vmatprep.subr.bf16.mxu0 %v1865
  %2788 = vmatpush2.bf16.msra.mxu0 %v1864
  %2789 = vmatprep.subr.bf16.mxu0 %v1861
  %2790 = vmatpush2.bf16.msra.mxu0 %v1860
  %2791 = vmatprep.subr.bf16.mxu0 %v1857
  %2792 = vmatpush2.bf16.msra.mxu0 %v1856
  %2793 = vmatprep.subr.bf16.mxu0 %v1853
  %2794 = vmatpush2.bf16.msra.mxu0 %v1852
  %2795 = vmatprep.mubr.bf16.mxu0 %v457
  %2796 = vmatmul.mubr.bf16.gmra.mxu0 %v456
  %v2797 = vpop.f32.mrf.mxu0
  %v2798 = vadd.f32 %v2757, %v2797
  %v2799 = vpop.f32.mrf.mxu0
  %v2800 = vadd.f32 %v2759, %v2799
  %v2801 = vpop.f32.mrf.mxu0
  %v2802 = vpop.f32.mrf.mxu0
  %2803 = vdwg.mxu0
  %2804 = vmatprep.subr.bf16.mxu0 %v1913
  %2805 = vmatpush1.bf16.msra.mxu0 %v1912
  %2806 = vmatprep.subr.bf16.mxu0 %v1909
  %2807 = vmatpush1.bf16.msra.mxu0 %v1908
  %2808 = vmatprep.subr.bf16.mxu0 %v1905
  %2809 = vmatpush1.bf16.msra.mxu0 %v1904
  %2810 = vmatprep.subr.bf16.mxu0 %v1901
  %2811 = vmatpush1.bf16.msra.mxu0 %v1900
  %2812 = vmatprep.subr.bf16.mxu0 %v1897
  %2813 = vmatpush1.bf16.msra.mxu0 %v1896
  %2814 = vmatprep.subr.bf16.mxu0 %v1893
  %2815 = vmatpush1.bf16.msra.mxu0 %v1892
  %2816 = vmatprep.subr.bf16.mxu0 %v1889
  %2817 = vmatpush1.bf16.msra.mxu0 %v1888
  %2818 = vmatprep.subr.bf16.mxu0 %v1885
  %2819 = vmatpush1.bf16.msra.mxu0 %v1884
  %2820 = vmatprep.subr.bf16.mxu0 %v1945
  %2821 = vmatpush2.bf16.msra.mxu0 %v1944
  %2822 = vmatprep.subr.bf16.mxu0 %v1941
  %2823 = vmatpush2.bf16.msra.mxu0 %v1940
  %2824 = vmatprep.subr.bf16.mxu0 %v1937
  %2825 = vmatpush2.bf16.msra.mxu0 %v1936
  %2826 = vmatprep.subr.bf16.mxu0 %v1933
  %2827 = vmatpush2.bf16.msra.mxu0 %v1932
  %2828 = vmatprep.subr.bf16.mxu0 %v1929
  %2829 = vmatpush2.bf16.msra.mxu0 %v1928
  %2830 = vmatprep.subr.bf16.mxu0 %v1925
  %2831 = vmatpush2.bf16.msra.mxu0 %v1924
  %2832 = vmatprep.subr.bf16.mxu0 %v1921
  %2833 = vmatpush2.bf16.msra.mxu0 %v1920
  %2834 = vmatprep.subr.bf16.mxu0 %v1917
  %2835 = vmatpush2.bf16.msra.mxu0 %v1916
  %2836 = vmatprep.mubr.bf16.mxu0 %v459
  %2837 = vmatmul.mubr.bf16.gmra.mxu0 %v458
  %v2838 = vpop.f32.mrf.mxu0
  %v2839 = vadd.f32 %v2798, %v2838
  %v2840 = vpop.f32.mrf.mxu0
  %v2841 = vadd.f32 %v2800, %v2840
  %v2842 = vpop.f32.mrf.mxu0
  %v2843 = vpop.f32.mrf.mxu0
  %2844 = vdwg.mxu0
  %2845 = vmatprep.subr.bf16.mxu0 %v1977
  %2846 = vmatpush1.bf16.msra.mxu0 %v1976
  %2847 = vmatprep.subr.bf16.mxu0 %v1973
  %2848 = vmatpush1.bf16.msra.mxu0 %v1972
  %2849 = vmatprep.subr.bf16.mxu0 %v1969
  %2850 = vmatpush1.bf16.msra.mxu0 %v1968
  %2851 = vmatprep.subr.bf16.mxu0 %v1965
  %2852 = vmatpush1.bf16.msra.mxu0 %v1964
  %2853 = vmatprep.subr.bf16.mxu0 %v1961
  %2854 = vmatpush1.bf16.msra.mxu0 %v1960
  %2855 = vmatprep.subr.bf16.mxu0 %v1957
  %2856 = vmatpush1.bf16.msra.mxu0 %v1956
  %2857 = vmatprep.subr.bf16.mxu0 %v1953
  %2858 = vmatpush1.bf16.msra.mxu0 %v1952
  %2859 = vmatprep.subr.bf16.mxu0 %v1949
  %2860 = vmatpush1.bf16.msra.mxu0 %v1948
  %2861 = vmatprep.subr.bf16.mxu0 %v2009
  %2862 = vmatpush2.bf16.msra.mxu0 %v2008
  %2863 = vmatprep.subr.bf16.mxu0 %v2005
  %2864 = vmatpush2.bf16.msra.mxu0 %v2004
  %2865 = vmatprep.subr.bf16.mxu0 %v2001
  %2866 = vmatpush2.bf16.msra.mxu0 %v2000
  %2867 = vmatprep.subr.bf16.mxu0 %v1997
  %2868 = vmatpush2.bf16.msra.mxu0 %v1996
  %2869 = vmatprep.subr.bf16.mxu0 %v1993
  %2870 = vmatpush2.bf16.msra.mxu0 %v1992
  %2871 = vmatprep.subr.bf16.mxu0 %v1989
  %2872 = vmatpush2.bf16.msra.mxu0 %v1988
  %2873 = vmatprep.subr.bf16.mxu0 %v1985
  %2874 = vmatpush2.bf16.msra.mxu0 %v1984
  %2875 = vmatprep.subr.bf16.mxu0 %v1981
  %2876 = vmatpush2.bf16.msra.mxu0 %v1980
  %2877 = vmatprep.mubr.bf16.mxu0 %v461
  %2878 = vmatmul.mubr.bf16.gmra.mxu0 %v460
  %v2879 = vpop.f32.mrf.mxu0
  %v2880 = vadd.f32 %v2839, %v2879
  %v2881 = vpop.f32.mrf.mxu0
  %v2882 = vadd.f32 %v2841, %v2881
  %v2883 = vpop.f32.mrf.mxu0
  %v2884 = vpop.f32.mrf.mxu0
  %2885 = vdwg.mxu0
  %v2886 = vmax.f32 %v2634, 0.0
  %v2887 = vmax.f32 %v2636, 0.0
  %v2888 = vmax.f32 %v2880, 0.0
  %v2889 = vmax.f32 %v2882, 0.0
  %v2890 = vld [vmem:[%s3] sm:$0xff]
  %v2891 = vld [vmem:[%s3 + $0x8] sm:$0xff]
  %v2892 = vld [vmem:[%s3 + $0x10] sm:$0xff]
  %v2893 = vld [vmem:[%s3 + $0x18] sm:$0xff]
  %v2894 = vld [vmem:[%s3 + $0x20] sm:$0xff]
  %v2895 = vld [vmem:[%s3 + $0x28] sm:$0xff]
  %v2896 = vld [vmem:[%s3 + $0x30] sm:$0xff]
  %v2897 = vld [vmem:[%s3 + $0x38] sm:$0xff]
  %v2898 = vld [vmem:[%s3 + $0x40] sm:$0xff]
  %v2899 = vld [vmem:[%s3 + $0x48] sm:$0xff]
  %v2900 = vld [vmem:[%s3 + $0x50] sm:$0xff]
  %v2901 = vld [vmem:[%s3 + $0x58] sm:$0xff]
  %v2902 = vld [vmem:[%s3 + $0x60] sm:$0xff]
  %v2903 = vld [vmem:[%s3 + $0x68] sm:$0xff]
  %v2904 = vld [vmem:[%s3 + $0x70] sm:$0xff]
  %v2905 = vld [vmem:[%s3 + $0x78] sm:$0xff]
  %v2906 = vld [vmem:[%s3 + $0x80] sm:$0xff]
  %v2907 = vld [vmem:[%s3 + $0x88] sm:$0xff]
  %v2908 = vld [vmem:[%s3 + $0x90] sm:$0xff]
  %v2909 = vld [vmem:[%s3 + $0x98] sm:$0xff]
  %v2910 = vld [vmem:[%s3 + $0xa0] sm:$0xff]
  %v2911 = vld [vmem:[%s3 + $0xa8] sm:$0xff]
  %v2912 = vld [vmem:[%s3 + $0xb0] sm:$0xff]
  %v2913 = vld [vmem:[%s3 + $0xb8] sm:$0xff]
  %v2914 = vld [vmem:[%s3 + $0xc0] sm:$0xff]
  %v2915 = vld [vmem:[%s3 + $0xc8] sm:$0xff]
  %v2916 = vld [vmem:[%s3 + $0xd0] sm:$0xff]
  %v2917 = vld [vmem:[%s3 + $0xd8] sm:$0xff]
  %v2918 = vld [vmem:[%s3 + $0xe0] sm:$0xff]
  %v2919 = vld [vmem:[%s3 + $0xe8] sm:$0xff]
  %v2920 = vld [vmem:[%s3 + $0xf0] sm:$0xff]
  %v2921 = vld [vmem:[%s3 + $0xf8] sm:$0xff]
  %v2922 = vld [vmem:[%s3 + $0x100] sm:$0xff]
  %v2923 = vld [vmem:[%s3 + $0x108] sm:$0xff]
  %v2924 = vld [vmem:[%s3 + $0x110] sm:$0xff]
  %v2925 = vld [vmem:[%s3 + $0x118] sm:$0xff]
  %v2926 = vld [vmem:[%s3 + $0x120] sm:$0xff]
  %v2927 = vld [vmem:[%s3 + $0x128] sm:$0xff]
  %v2928 = vld [vmem:[%s3 + $0x130] sm:$0xff]
  %v2929 = vld [vmem:[%s3 + $0x138] sm:$0xff]
  %v2930 = vld [vmem:[%s3 + $0x140] sm:$0xff]
  %v2931 = vld [vmem:[%s3 + $0x148] sm:$0xff]
  %v2932 = vld [vmem:[%s3 + $0x150] sm:$0xff]
  %v2933 = vld [vmem:[%s3 + $0x158] sm:$0xff]
  %v2934 = vld [vmem:[%s3 + $0x160] sm:$0xff]
  %v2935 = vld [vmem:[%s3 + $0x168] sm:$0xff]
  %v2936 = vld [vmem:[%s3 + $0x170] sm:$0xff]
  %v2937 = vld [vmem:[%s3 + $0x178] sm:$0xff]
  %v2938 = vld [vmem:[%s3 + $0x180] sm:$0xff]
  %v2939 = vld [vmem:[%s3 + $0x188] sm:$0xff]
  %v2940 = vld [vmem:[%s3 + $0x190] sm:$0xff]
  %v2941 = vld [vmem:[%s3 + $0x198] sm:$0xff]
  %v2942 = vld [vmem:[%s3 + $0x1a0] sm:$0xff]
  %v2943 = vld [vmem:[%s3 + $0x1a8] sm:$0xff]
  %v2944 = vld [vmem:[%s3 + $0x1b0] sm:$0xff]
  %v2945 = vld [vmem:[%s3 + $0x1b8] sm:$0xff]
  %v2946 = vld [vmem:[%s3 + $0x1c0] sm:$0xff]
  %v2947 = vld [vmem:[%s3 + $0x1c8] sm:$0xff]
  %v2948 = vld [vmem:[%s3 + $0x1d0] sm:$0xff]
  %v2949 = vld [vmem:[%s3 + $0x1d8] sm:$0xff]
  %v2950 = vld [vmem:[%s3 + $0x1e0] sm:$0xff]
  %v2951 = vld [vmem:[%s3 + $0x1e8] sm:$0xff]
  %v2952 = vld [vmem:[%s3 + $0x1f0] sm:$0xff]
  %v2953 = vld [vmem:[%s3 + $0x1f8] sm:$0xff]
  %v2954 = vld [vmem:[%s4] sm:$0x1]
  %v2956 = vlaneseq
  %v2957 = vshrl.u32 %v2956, 7
  %v2958 = vsub.s32 0, %v2957
  %v2959 = vrot.slane %v2954, %v2958
  %2961 = vmatprep.subr.mxu0 0.0
  %2962 = vmatpush1.msra.mxu0 %v2905
  %2963 = vmatprep.subr.mxu0 0.0
  %2964 = vmatpush1.msra.mxu0 %v2904
  %2965 = vmatprep.subr.mxu0 0.0
  %2966 = vmatpush1.msra.mxu0 %v2903
  %2967 = vmatprep.subr.mxu0 0.0
  %2968 = vmatpush1.msra.mxu0 %v2902
  %2969 = vmatprep.subr.mxu0 0.0
  %2970 = vmatpush1.msra.mxu0 %v2901
  %2971 = vmatprep.subr.mxu0 0.0
  %2972 = vmatpush1.msra.mxu0 %v2900
  %2973 = vmatprep.subr.mxu0 0.0
  %2974 = vmatpush1.msra.mxu0 %v2899
  %2975 = vmatprep.subr.mxu0 0.0
  %2976 = vmatpush1.msra.mxu0 %v2898
  %2977 = vmatprep.subr.mxu0 0.0
  %2978 = vmatpush1.msra.mxu0 %v2897
  %2979 = vmatprep.subr.mxu0 0.0
  %2980 = vmatpush1.msra.mxu0 %v2896
  %2981 = vmatprep.subr.mxu0 0.0
  %2982 = vmatpush1.msra.mxu0 %v2895
  %2983 = vmatprep.subr.mxu0 0.0
  %2984 = vmatpush1.msra.mxu0 %v2894
  %2985 = vmatprep.subr.mxu0 0.0
  %2986 = vmatpush1.msra.mxu0 %v2893
  %2987 = vmatprep.subr.mxu0 0.0
  %2988 = vmatpush1.msra.mxu0 %v2892
  %2989 = vmatprep.subr.mxu0 0.0
  %2990 = vmatpush1.msra.mxu0 %v2891
  %2991 = vmatprep.subr.mxu0 0.0
  %2992 = vmatpush1.msra.mxu0 %v2890
  %2993 = vmatprep.subr.mxu0 0.0
  %2994 = vmatpush2.msra.mxu0 %v2921
  %2995 = vmatprep.subr.mxu0 0.0
  %2996 = vmatpush2.msra.mxu0 %v2920
  %2997 = vmatprep.subr.mxu0 0.0
  %2998 = vmatpush2.msra.mxu0 %v2919
  %2999 = vmatprep.subr.mxu0 0.0
  %3000 = vmatpush2.msra.mxu0 %v2918
  %3001 = vmatprep.subr.mxu0 0.0
  %3002 = vmatpush2.msra.mxu0 %v2917
  %3003 = vmatprep.subr.mxu0 0.0
  %3004 = vmatpush2.msra.mxu0 %v2916
  %3005 = vmatprep.subr.mxu0 0.0
  %3006 = vmatpush2.msra.mxu0 %v2915
  %3007 = vmatprep.subr.mxu0 0.0
  %3008 = vmatpush2.msra.mxu0 %v2914
  %3009 = vmatprep.subr.mxu0 0.0
  %3010 = vmatpush2.msra.mxu0 %v2913
  %3011 = vmatprep.subr.mxu0 0.0
  %3012 = vmatpush2.msra.mxu0 %v2912
  %3013 = vmatprep.subr.mxu0 0.0
  %3014 = vmatpush2.msra.mxu0 %v2911
  %3015 = vmatprep.subr.mxu0 0.0
  %3016 = vmatpush2.msra.mxu0 %v2910
  %3017 = vmatprep.subr.mxu0 0.0
  %3018 = vmatpush2.msra.mxu0 %v2909
  %3019 = vmatprep.subr.mxu0 0.0
  %3020 = vmatpush2.msra.mxu0 %v2908
  %3021 = vmatprep.subr.mxu0 0.0
  %3022 = vmatpush2.msra.mxu0 %v2907
  %3023 = vmatprep.subr.mxu0 0.0
  %3024 = vmatpush2.msra.mxu0 %v2906
  %3025 = vmatprep.mubr.f32.mxu0 %v2887
  %3026 = vmatmul.mubr.f32.gmra.mxu0 %v2886
  %v3027 = vpop.f32.mrf.mxu0
  %v3028 = vadd.f32 %v2959, %v3027
  %v3029 = vpop.f32.mrf.mxu0
  %3030 = vdwg.mxu0
  %3031 = vmatprep.subr.mxu0 0.0
  %3032 = vmatpush1.msra.mxu0 %v2937
  %3033 = vmatprep.subr.mxu0 0.0
  %3034 = vmatpush1.msra.mxu0 %v2936
  %3035 = vmatprep.subr.mxu0 0.0
  %3036 = vmatpush1.msra.mxu0 %v2935
  %3037 = vmatprep.subr.mxu0 0.0
  %3038 = vmatpush1.msra.mxu0 %v2934
  %3039 = vmatprep.subr.mxu0 0.0
  %3040 = vmatpush1.msra.mxu0 %v2933
  %3041 = vmatprep.subr.mxu0 0.0
  %3042 = vmatpush1.msra.mxu0 %v2932
  %3043 = vmatprep.subr.mxu0 0.0
  %3044 = vmatpush1.msra.mxu0 %v2931
  %3045 = vmatprep.subr.mxu0 0.0
  %3046 = vmatpush1.msra.mxu0 %v2930
  %3047 = vmatprep.subr.mxu0 0.0
  %3048 = vmatpush1.msra.mxu0 %v2929
  %3049 = vmatprep.subr.mxu0 0.0
  %3050 = vmatpush1.msra.mxu0 %v2928
  %3051 = vmatprep.subr.mxu0 0.0
  %3052 = vmatpush1.msra.mxu0 %v2927
  %3053 = vmatprep.subr.mxu0 0.0
  %3054 = vmatpush1.msra.mxu0 %v2926
  %3055 = vmatprep.subr.mxu0 0.0
  %3056 = vmatpush1.msra.mxu0 %v2925
  %3057 = vmatprep.subr.mxu0 0.0
  %3058 = vmatpush1.msra.mxu0 %v2924
  %3059 = vmatprep.subr.mxu0 0.0
  %3060 = vmatpush1.msra.mxu0 %v2923
  %3061 = vmatprep.subr.mxu0 0.0
  %3062 = vmatpush1.msra.mxu0 %v2922
  %3063 = vmatprep.subr.mxu0 0.0
  %3064 = vmatpush2.msra.mxu0 %v2953
  %3065 = vmatprep.subr.mxu0 0.0
  %3066 = vmatpush2.msra.mxu0 %v2952
  %3067 = vmatprep.subr.mxu0 0.0
  %3068 = vmatpush2.msra.mxu0 %v2951
  %3069 = vmatprep.subr.mxu0 0.0
  %3070 = vmatpush2.msra.mxu0 %v2950
  %3071 = vmatprep.subr.mxu0 0.0
  %3072 = vmatpush2.msra.mxu0 %v2949
  %3073 = vmatprep.subr.mxu0 0.0
  %3074 = vmatpush2.msra.mxu0 %v2948
  %3075 = vmatprep.subr.mxu0 0.0
  %3076 = vmatpush2.msra.mxu0 %v2947
  %3077 = vmatprep.subr.mxu0 0.0
  %3078 = vmatpush2.msra.mxu0 %v2946
  %3079 = vmatprep.subr.mxu0 0.0
  %3080 = vmatpush2.msra.mxu0 %v2945
  %3081 = vmatprep.subr.mxu0 0.0
  %3082 = vmatpush2.msra.mxu0 %v2944
  %3083 = vmatprep.subr.mxu0 0.0
  %3084 = vmatpush2.msra.mxu0 %v2943
  %3085 = vmatprep.subr.mxu0 0.0
  %3086 = vmatpush2.msra.mxu0 %v2942
  %3087 = vmatprep.subr.mxu0 0.0
  %3088 = vmatpush2.msra.mxu0 %v2941
  %3089 = vmatprep.subr.mxu0 0.0
  %3090 = vmatpush2.msra.mxu0 %v2940
  %3091 = vmatprep.subr.mxu0 0.0
  %3092 = vmatpush2.msra.mxu0 %v2939
  %3093 = vmatprep.subr.mxu0 0.0
  %3094 = vmatpush2.msra.mxu0 %v2938
  %3095 = vmatprep.mubr.f32.mxu0 %v2889
  %3096 = vmatmul.mubr.f32.gmra.mxu0 %v2888
  %v3097 = vpop.f32.mrf.mxu0
  %v3098 = vadd.f32 %v3028, %v3097
  %v3099 = vpop.f32.mrf.mxu0
  %3100 = vdwg.mxu0
  %3101 = vst [vmem:[%s5] sm:$0xff] %v3098
  // Predicated region
  $region22: #{bridgetower_head.1} parent=0 // pred_check
    _
  $region23: #{bridgetower_head.1} parent=0 // pred_check_branch
    %3103 = sbr.rel (0) target = $region25
  $region24: #{bridgetower_head.1} parent=0 // pred_region
    _
  $region25: #{bridgetower_head.1} parent=0 // pred_fallthru
    _
  // Predicated region
  $region26: #{bridgetower_head.1} parent=0 // pred_check
    _
  $region27: #{bridgetower_head.1} parent=0 // pred_check_branch
    %3105 = sbr.rel (0) target = $region29
  $region28: #{bridgetower_head.1} parent=0 // pred_region
    _
  $region29: #{bridgetower_head.1} parent=0 // pred_fallthru
    _

</llo_original>
